<compile_context>
chip_gen: v7x
topology: tpu7x:2x2x1
jax: 0.10.0
libtpu: 0.0.40
codegen_flags: <defaults>
</compile_context>

<pallas_src>
import jax
import jax.numpy as jnp
from jax import lax
from jax.experimental import pallas as pl
from jax.experimental.pallas import tpu as pltpu

# Fixed architecture of the DCGAN generator (five ConvTranspose2d, k=4).
KSIZE = 4
STRIDES = (1, 2, 2, 2, 2)
PADDINGS = (0, 1, 1, 1, 1)
BN_EPS = 1e-5


# ----------------------------- Pallas kernels ------------------------------

def _matmul_bn_kernel(w_ref, x_ref, y_ref, s_ref, ss_ref):
    """(C, K) @ (K, tm) matmul with fused per-channel sum / sum-of-squares."""
    @pl.when(pl.program_id(0) == 0)
    def _():
        s_ref[...] = jnp.zeros_like(s_ref)
        ss_ref[...] = jnp.zeros_like(ss_ref)

    acc = jnp.dot(w_ref[...], x_ref[...], preferred_element_type=jnp.float32)
    y_ref[...] = acc.astype(y_ref.dtype)
    # Cross-lane reductions go to the XLU (free slot relative to the MXU).
    s_ref[...] += jnp.sum(acc, axis=1, keepdims=True)
    ss_ref[...] += jnp.sum(acc * acc, axis=1, keepdims=True)


def _matmul_tanh_kernel(w_ref, x_ref, y_ref):
    """(C, K) @ (K, tm) matmul with fused tanh epilogue (f32 math)."""
    acc = jnp.dot(w_ref[...], x_ref[...], preferred_element_type=jnp.float32)
    y_ref[...] = jnp.tanh(acc).astype(y_ref.dtype)


def _affine_relu_kernel(y_ref, scale_ref, shift_ref, o_ref):
    """Per-channel affine (BN) + ReLU, lane-dense over M."""
    y = y_ref[...].astype(jnp.float32)
    o_ref[...] = jnp.maximum(y * scale_ref[...] + shift_ref[...],
                             0.0).astype(o_ref.dtype)


# --------------------------- pallas_call wrappers ---------------------------

def _pick_tm(m, cap=2048):
    """Largest lane-dense M tile: full m if it fits, else a multiple of 128."""
    if m <= cap:
        return m
    for tm in range(cap, 127, -128):
        if m % tm == 0:
            return tm
    tm = cap
    while m % tm:
        tm //= 2
    return max(tm, 8)


def matmul_bn_stats(w, x):
    """y = w @ x  (lane-dense (C, M) output) plus fused BN batch statistics."""
    c, k = w.shape
    k2, m = x.shape
    assert k == k2
    tm = _pick_tm(m)
    return pl.pallas_call(
        _matmul_bn_kernel,
        out_shape=(jax.ShapeDtypeStruct((c, m), jnp.bfloat16),
                   jax.ShapeDtypeStruct((c, 1), jnp.float32),
                   jax.ShapeDtypeStruct((c, 1), jnp.float32)),
        grid_spec=pltpu.PrefetchScalarGridSpec(
            num_scalar_prefetch=0,
            grid=(m // tm,),
            in_specs=[pl.BlockSpec((c, k), lambda i: (0, 0)),
                      pl.BlockSpec((k, tm), lambda i: (0, i))],
            out_specs=(pl.BlockSpec((c, tm), lambda i: (0, i)),
                       pl.BlockSpec((c, 1), lambda i: (0, 0)),
                       pl.BlockSpec((c, 1), lambda i: (0, 0)))),
        # Resident stat accumulators across the M grid axis -> must be serial.
        compiler_params=pltpu.CompilerParams(
            dimension_semantics=("arbitrary",)),
    )(w, x)


def matmul_tanh(w, x):
    """y = tanh(w @ x), lane-dense (C, M) f32 output (final layer)."""
    c, k = w.shape
    k2, m = x.shape
    assert k == k2
    tm = _pick_tm(m)
    return pl.pallas_call(
        _matmul_tanh_kernel,
        out_shape=jax.ShapeDtypeStruct((c, m), jnp.float32),
        grid_spec=pltpu.PrefetchScalarGridSpec(
            num_scalar_prefetch=0,
            grid=(m // tm,),
            in_specs=[pl.BlockSpec((c, k), lambda i: (0, 0)),
                      pl.BlockSpec((k, tm), lambda i: (0, i))],
            out_specs=pl.BlockSpec((c, tm), lambda i: (0, i))),
        compiler_params=pltpu.CompilerParams(
            dimension_semantics=("parallel",)),
    )(w, x)


def affine_relu(y, scale, shift):
    """Fused BN affine + ReLU on a (C, M) activation (bf16 out)."""
    c, m = y.shape
    tm = _pick_tm(m)
    return pl.pallas_call(
        _affine_relu_kernel,
        out_shape=jax.ShapeDtypeStruct((c, m), jnp.bfloat16),
        grid_spec=pltpu.PrefetchScalarGridSpec(
            num_scalar_prefetch=0,
            grid=(m // tm,),
            in_specs=[pl.BlockSpec((c, tm), lambda i: (0, i)),
                      pl.BlockSpec((c, 1), lambda i: (0, 0)),
                      pl.BlockSpec((c, 1), lambda i: (0, 0))],
            out_specs=pl.BlockSpec((c, tm), lambda i: (0, i))),
        compiler_params=pltpu.CompilerParams(
            dimension_semantics=("parallel",)),
    )(y, scale, shift)


# ----------------------------- layer-level glue -----------------------------

def _flipped_weight(w):
    # (Cin, Cout, KH, KW) -> (Cout, KH, KW, Cin), spatially flipped taps.
    return jnp.transpose(w[:, :, ::-1, ::-1], (1, 2, 3, 0))


def _convT_pieces(x, w, stride, pad):
    """Lower one ConvTranspose2d(bias=False) to matmul pieces.

    x : (Cin, N, H, W) activation (channel-major).
    w : PyTorch ConvTranspose2d weight, (Cin, Cout, KH, KW).
    Returns (pieces, assemble, (Cout, N, Ho, Wo)) where each piece is a
    (weight (Cout, K) bf16, patchesT (K, M) bf16) pair and assemble(ys)
    maps the per-piece (Cout, M) outputs to (Cout, N, Ho, Wo).
    """
    cin, n, h, wd = x.shape
    _, cout, kh, kw = w.shape
    wflip = _flipped_weight(w)                         # (Cout, KH, KW, Cin)

    if stride == 1:
        # Plain conv of the (padded) input with the flipped kernel.  Used for
        # the 1x1 -> 4x4 projection layer (tiny).
        pp = kh - 1 - pad
        ho, wo = h - 2 * pad + kh - 1, wd - 2 * pad + kw - 1
        xp = jnp.pad(x, ((0, 0), (0, 0), (pp, pp), (pp, pp)))
        taps = [xp[:, :, dh:dh + ho, dw:dw + wo]
                for dh in range(kh) for dw in range(kw)]
        patches = jnp.stack(taps, 0).reshape(kh * kw * cin, n * ho * wo)
        pieces = [(wflip.reshape(cout, kh * kw * cin).astype(jnp.bfloat16),
                   patches.astype(jnp.bfloat16))]

        def assemble(ys):
            return ys[0].reshape(cout, n, ho, wo)

        return pieces, assemble, (cout, n, ho, wo)

    # Stride-2, pad-1, 4x4: sub-pixel decomposition into four 2x2 convs over
    # the un-dilated input; the four outputs are parity-interleaved.
    assert stride == 2 and pad == 1 and kh == 4 and kw == 4
    ho, wo = 2 * h, 2 * wd
    xp = jnp.pad(x, ((0, 0), (0, 0), (1, 1), (1, 1)))
    pieces = []
    for a in (0, 1):
        for b in (0, 1):
            # sub-kernel taps (dh', dw') map to full-kernel taps (a+2dh', b+2dw')
            wsub = wflip[:, a::2, b::2, :].reshape(cout, 4 * cin)
            taps = [xp[:, :, a + dh:a + dh + h, b + dw:b + dw + wd]
                    for dh in (0, 1) for dw in (0, 1)]
            psub = jnp.stack(taps, 0).reshape(4 * cin, n * h * wd)
            pieces.append((wsub.astype(jnp.bfloat16),
                           psub.astype(jnp.bfloat16)))

    def assemble(ys):
        y = [yy.reshape(cout, n, h, wd) for yy in ys]  # (0,0),(0,1),(1,0),(1,1)
        row0 = jnp.stack([y[0], y[1]], axis=-1)        # interleave b for a=0
        row1 = jnp.stack([y[2], y[3]], axis=-1)        # interleave b for a=1
        full = jnp.stack([row0, row1], axis=3)         # (c, n, h, 2, w, 2)
        return full.reshape(cout, n, ho, wo)

    return pieces, assemble, (cout, n, ho, wo)


def generator_forward(x_nchw, params):
    """DCGAN Generator forward: ConvT -> BN(train stats) -> ReLU x4, ConvT -> Tanh."""
    # Channel-major layout: (C, N, H, W); N*H*W flattens onto the lane axis.
    x = jnp.transpose(x_nchw, (1, 0, 2, 3))
    n_layers = len(params["w"])
    for li in range(n_layers):
        w = params["w"][li]
        last = li == n_layers - 1
        pieces, assemble, (cout, n, ho, wo) = _convT_pieces(
            x, w, STRIDES[li], PADDINGS[li])

        if last:
            ys = [matmul_tanh(wm, pm) for wm, pm in pieces]  # tanh fused
            x = assemble(ys)                                 # (3, N, 64, 64) f32
        else:
            ys, s_tot, ss_tot = [], 0.0, 0.0
            for wm, pm in pieces:
                y, s, ss = matmul_bn_stats(wm, pm)           # stats fused
                ys.append(y)
                s_tot = s_tot + s
                ss_tot = ss_tot + ss
            cnt = n * ho * wo
            mean = s_tot / cnt
            # E[x^2] - mean^2 (biased var, PyTorch training-mode norm); clamp
            # guards f32 cancellation at larger activation magnitudes.
            var = jnp.maximum(ss_tot / cnt - mean * mean, 0.0)
            gamma = params["gamma"][li].reshape(cout, 1)
            beta = params["beta"][li].reshape(cout, 1)
            scale = gamma * lax.rsqrt(var + BN_EPS)
            shift = beta - mean * scale
            y2d = assemble(ys).reshape(cout, n * ho * wo)
            x = affine_relu(y2d, scale, shift).reshape(cout, n, ho, wo)

    return jnp.transpose(x, (1, 0, 2, 3))                    # NCHW


# ------------------------------ parameter init ------------------------------

def init_params(key, nz=16, ngf=8, nc=3):
    chans = [nz, ngf * 8, ngf * 4, ngf * 2, ngf, nc]
    ws, gammas, betas = [], [], []
    for i in range(5):
        key, sub = jax.random.split(key)
        # DCGAN-style N(0, 0.02) init; convs have no bias.
        ws.append(0.02 * jax.random.normal(
            sub, (chans[i], chans[i + 1], KSIZE, KSIZE), jnp.float32))
        if i < 4:
            # PyTorch BatchNorm2d default init: weight=1, bias=0.
            gammas.append(jnp.ones((chans[i + 1],), jnp.float32))
            betas.append(jnp.zeros((chans[i + 1],), jnp.float32))
    return {"w": ws, "gamma": gammas, "beta": betas}


# ----------------------------------- main -----------------------------------

if __name__ == "__main__":
    nz, ngf, nc, batch = 16, 8, 3, 2
    key = jax.random.PRNGKey(0)
    kp, kx = jax.random.split(key)

    params = init_params(kp, nz=nz, ngf=ngf, nc=nc)
    x = jax.random.normal(kx, (batch, nz, 1, 1), jnp.float32)  # DCGAN latent

    fwd = jax.jit(generator_forward)
    out = jax.block_until_ready(fwd(x, params))

    assert out.shape == (batch, nc, 64, 64), out.shape
    assert bool(jnp.all(jnp.isfinite(out)))
    print("KERNEL_OK")
</pallas_src>

<mosaic_0001>
module attributes {stable_mosaic.version = 11 : i64} {
  func.func @_matmul_bn_kernel(%arg0: i32, %arg1: memref<64x256xbf16, #tpu.memory_space<vmem>>, %arg2: memref<256x32xbf16, #tpu.memory_space<vmem>>, %arg3: memref<64x32xbf16, #tpu.memory_space<vmem>>, %arg4: memref<64x1xf32, #tpu.memory_space<vmem>>, %arg5: memref<64x1xf32, #tpu.memory_space<vmem>>) attributes {dimension_semantics = [#tpu.dimension_semantics<arbitrary>], iteration_bounds = array<i64: 1>, scalar_prefetch = 0 : i64, scratch_operands = 0 : i64, tpu.core_type = #tpu.core_type<tc>, window_params = [{pipeline_mode = #tpu.pipeline_mode<synchronous>, transform_indices = @transform_0, window_bounds = array<i64: 64, 256>}, {transform_indices = @transform_1, window_bounds = array<i64: 256, 32>}, {transform_indices = @transform_2, window_bounds = array<i64: 64, 32>}, {pipeline_mode = #tpu.pipeline_mode<synchronous>, transform_indices = @transform_3, window_bounds = array<i64: 64, 1>}, {pipeline_mode = #tpu.pipeline_mode<synchronous>, transform_indices = @transform_4, window_bounds = array<i64: 64, 1>}]} {
    %c0_i32 = arith.constant 0 : i32
    %0 = arith.cmpi eq, %arg0, %c0_i32 : i32
    %1 = arith.extui %0 : i1 to i32
    %c0_i32_0 = arith.constant 0 : i32
    %2 = arith.cmpi ne, %1, %c0_i32_0 : i32
    scf.if %2 {
      %cst_16 = arith.constant 0.000000e+00 : f32
      %19 = vector.broadcast %cst_16 : f32 to vector<64x1xf32>
      %c0_17 = arith.constant 0 : index
      %c0_18 = arith.constant 0 : index
      %20 = vector.load %arg4[%c0_17, %c0_18] : memref<64x1xf32, #tpu.memory_space<vmem>>, vector<64x1xf32>
      tpu.vector_store %arg4[%c0_17, %c0_18], %19 {strides = array<i32>} : memref<64x1xf32, #tpu.memory_space<vmem>>, vector<64x1xf32>,
      %cst_19 = arith.constant 0.000000e+00 : f32
      %21 = vector.broadcast %cst_19 : f32 to vector<64x1xf32>
      %c0_20 = arith.constant 0 : index
      %c0_21 = arith.constant 0 : index
      %22 = vector.load %arg5[%c0_20, %c0_21] : memref<64x1xf32, #tpu.memory_space<vmem>>, vector<64x1xf32>
      tpu.vector_store %arg5[%c0_20, %c0_21], %21 {strides = array<i32>} : memref<64x1xf32, #tpu.memory_space<vmem>>, vector<64x1xf32>,
    } else {
    }
    %c0 = arith.constant 0 : index
    %c0_1 = arith.constant 0 : index
    %3 = vector.load %arg1[%c0, %c0_1] : memref<64x256xbf16, #tpu.memory_space<vmem>>, vector<64x256xbf16>
    %c0_2 = arith.constant 0 : index
    %c0_3 = arith.constant 0 : index
    %4 = vector.load %arg2[%c0_2, %c0_3] : memref<256x32xbf16, #tpu.memory_space<vmem>>, vector<256x32xbf16>
    %cst = arith.constant dense<0.000000e+00> : vector<64x32xf32>
    %5 = tpu.matmul %3, %4, %cst {dimension_numbers = #tpu.dot_dimension_numbers<[1], [0], [0], [1], [0, 0, 1, 1], [], []>} : vector<64x256xbf16>, vector<256x32xbf16>, vector<64x32xf32> -> vector<64x32xf32>
    %6 = arith.truncf %5 : vector<64x32xf32> to vector<64x32xbf16>
    %c0_4 = arith.constant 0 : index
    %c0_5 = arith.constant 0 : index
    %7 = vector.load %arg3[%c0_4, %c0_5] : memref<64x32xbf16, #tpu.memory_space<vmem>>, vector<64x32xbf16>
    tpu.vector_store %arg3[%c0_4, %c0_5], %6 {strides = array<i32>} : memref<64x32xbf16, #tpu.memory_space<vmem>>, vector<64x32xbf16>,
    %c0_6 = arith.constant 0 : index
    %c0_7 = arith.constant 0 : index
    %8 = vector.load %arg4[%c0_6, %c0_7] : memref<64x1xf32, #tpu.memory_space<vmem>>, vector<64x1xf32>
    %cst_8 = arith.constant dense<0.000000e+00> : vector<64xf32>
    %9 = vector.multi_reduction <add>, %5, %cst_8 [1] : vector<64x32xf32> to vector<64xf32>
    %10 = vector.shape_cast %9 : vector<64xf32> to vector<64x1xf32>
    %11 = arith.addf %8, %10 : vector<64x1xf32>
    %c0_9 = arith.constant 0 : index
    %c0_10 = arith.constant 0 : index
    %12 = vector.load %arg4[%c0_9, %c0_10] : memref<64x1xf32, #tpu.memory_space<vmem>>, vector<64x1xf32>
    tpu.vector_store %arg4[%c0_9, %c0_10], %11 {strides = array<i32>} : memref<64x1xf32, #tpu.memory_space<vmem>>, vector<64x1xf32>,
    %c0_11 = arith.constant 0 : index
    %c0_12 = arith.constant 0 : index
    %13 = vector.load %arg5[%c0_11, %c0_12] : memref<64x1xf32, #tpu.memory_space<vmem>>, vector<64x1xf32>
    %14 = arith.mulf %5, %5 : vector<64x32xf32>
    %cst_13 = arith.constant dense<0.000000e+00> : vector<64xf32>
    %15 = vector.multi_reduction <add>, %14, %cst_13 [1] : vector<64x32xf32> to vector<64xf32>
    %16 = vector.shape_cast %15 : vector<64xf32> to vector<64x1xf32>
    %17 = arith.addf %13, %16 : vector<64x1xf32>
    %c0_14 = arith.constant 0 : index
    %c0_15 = arith.constant 0 : index
    %18 = vector.load %arg5[%c0_14, %c0_15] : memref<64x1xf32, #tpu.memory_space<vmem>>, vector<64x1xf32>
    tpu.vector_store %arg5[%c0_14, %c0_15], %17 {strides = array<i32>} : memref<64x1xf32, #tpu.memory_space<vmem>>, vector<64x1xf32>,
    return
  }
  func.func @transform_0(%arg0: i32) -> (i32, i32) {
    %c0_i32 = arith.constant 0 : i32
    %c0_i32_0 = arith.constant 0 : i32
    %c0_i32_1 = arith.constant 0 : i32
    return %c0_i32, %c0_i32_0 : i32, i32
  }
  func.func @transform_1(%arg0: i32) -> (i32, i32) {
    %c0_i32 = arith.constant 0 : i32
    %c0_i32_0 = arith.constant 0 : i32
    return %c0_i32, %arg0 : i32, i32
  }
  func.func @transform_2(%arg0: i32) -> (i32, i32) {
    %c0_i32 = arith.constant 0 : i32
    %c0_i32_0 = arith.constant 0 : i32
    return %c0_i32, %arg0 : i32, i32
  }
  func.func @transform_3(%arg0: i32) -> (i32, i32) {
    %c0_i32 = arith.constant 0 : i32
    %c0_i32_0 = arith.constant 0 : i32
    %c0_i32_1 = arith.constant 0 : i32
    return %c0_i32, %c0_i32_0 : i32, i32
  }
  func.func @transform_4(%arg0: i32) -> (i32, i32) {
    %c0_i32 = arith.constant 0 : i32
    %c0_i32_0 = arith.constant 0 : i32
    %c0_i32_1 = arith.constant 0 : i32
    return %c0_i32, %c0_i32_0 : i32, i32
  }
}

module attributes {stable_mosaic.version = 11 : i64} {
  func.func @_affine_relu_kernel(%arg0: i32, %arg1: memref<64x32xbf16, #tpu.memory_space<vmem>>, %arg2: memref<64x1xf32, #tpu.memory_space<vmem>>, %arg3: memref<64x1xf32, #tpu.memory_space<vmem>>, %arg4: memref<64x32xbf16, #tpu.memory_space<vmem>>) attributes {dimension_semantics = [#tpu.dimension_semantics<parallel>], iteration_bounds = array<i64: 1>, scalar_prefetch = 0 : i64, scratch_operands = 0 : i64, tpu.core_type = #tpu.core_type<tc>, window_params = [{transform_indices = @transform_0, window_bounds = array<i64: 64, 32>}, {pipeline_mode = #tpu.pipeline_mode<synchronous>, transform_indices = @transform_1, window_bounds = array<i64: 64, 1>}, {pipeline_mode = #tpu.pipeline_mode<synchronous>, transform_indices = @transform_2, window_bounds = array<i64: 64, 1>}, {transform_indices = @transform_3, window_bounds = array<i64: 64, 32>}]} {
    %c0 = arith.constant 0 : index
    %c0_0 = arith.constant 0 : index
    %0 = vector.load %arg1[%c0, %c0_0] : memref<64x32xbf16, #tpu.memory_space<vmem>>, vector<64x32xbf16>
    %1 = arith.extf %0 : vector<64x32xbf16> to vector<64x32xf32>
    %c0_1 = arith.constant 0 : index
    %c0_2 = arith.constant 0 : index
    %2 = vector.load %arg2[%c0_1, %c0_2] : memref<64x1xf32, #tpu.memory_space<vmem>>, vector<64x1xf32>
    %3 = vector.broadcast %2 : vector<64x1xf32> to vector<64x32xf32>
    %4 = arith.mulf %1, %3 : vector<64x32xf32>
    %c0_3 = arith.constant 0 : index
    %c0_4 = arith.constant 0 : index
    %5 = vector.load %arg3[%c0_3, %c0_4] : memref<64x1xf32, #tpu.memory_space<vmem>>, vector<64x1xf32>
    %6 = vector.broadcast %5 : vector<64x1xf32> to vector<64x32xf32>
    %7 = arith.addf %4, %6 : vector<64x32xf32>
    %cst = arith.constant 0.000000e+00 : f32
    %8 = vector.broadcast %cst : f32 to vector<64x32xf32>
    %9 = arith.maximumf %7, %8 : vector<64x32xf32>
    %10 = arith.truncf %9 : vector<64x32xf32> to vector<64x32xbf16>
    %c0_5 = arith.constant 0 : index
    %c0_6 = arith.constant 0 : index
    %11 = vector.load %arg4[%c0_5, %c0_6] : memref<64x32xbf16, #tpu.memory_space<vmem>>, vector<64x32xbf16>
    tpu.vector_store %arg4[%c0_5, %c0_6], %10 {strides = array<i32>} : memref<64x32xbf16, #tpu.memory_space<vmem>>, vector<64x32xbf16>,
    return
  }
  func.func @transform_0(%arg0: i32) -> (i32, i32) {
    %c0_i32 = arith.constant 0 : i32
    %c0_i32_0 = arith.constant 0 : i32
    return %c0_i32, %arg0 : i32, i32
  }
  func.func @transform_1(%arg0: i32) -> (i32, i32) {
    %c0_i32 = arith.constant 0 : i32
    %c0_i32_0 = arith.constant 0 : i32
    %c0_i32_1 = arith.constant 0 : i32
    return %c0_i32, %c0_i32_0 : i32, i32
  }
  func.func @transform_2(%arg0: i32) -> (i32, i32) {
    %c0_i32 = arith.constant 0 : i32
    %c0_i32_0 = arith.constant 0 : i32
    %c0_i32_1 = arith.constant 0 : i32
    return %c0_i32, %c0_i32_0 : i32, i32
  }
  func.func @transform_3(%arg0: i32) -> (i32, i32) {
    %c0_i32 = arith.constant 0 : i32
    %c0_i32_0 = arith.constant 0 : i32
    return %c0_i32, %arg0 : i32, i32
  }
}

module attributes {stable_mosaic.version = 11 : i64} {
  func.func @_matmul_bn_kernel(%arg0: i32, %arg1: memref<32x256xbf16, #tpu.memory_space<vmem>>, %arg2: memref<256x32xbf16, #tpu.memory_space<vmem>>, %arg3: memref<32x32xbf16, #tpu.memory_space<vmem>>, %arg4: memref<32x1xf32, #tpu.memory_space<vmem>>, %arg5: memref<32x1xf32, #tpu.memory_space<vmem>>) attributes {dimension_semantics = [#tpu.dimension_semantics<arbitrary>], iteration_bounds = array<i64: 1>, scalar_prefetch = 0 : i64, scratch_operands = 0 : i64, tpu.core_type = #tpu.core_type<tc>, window_params = [{pipeline_mode = #tpu.pipeline_mode<synchronous>, transform_indices = @transform_0, window_bounds = array<i64: 32, 256>}, {transform_indices = @transform_1, window_bounds = array<i64: 256, 32>}, {transform_indices = @transform_2, window_bounds = array<i64: 32, 32>}, {pipeline_mode = #tpu.pipeline_mode<synchronous>, transform_indices = @transform_3, window_bounds = array<i64: 32, 1>}, {pipeline_mode = #tpu.pipeline_mode<synchronous>, transform_indices = @transform_4, window_bounds = array<i64: 32, 1>}]} {
    %c0_i32 = arith.constant 0 : i32
    %0 = arith.cmpi eq, %arg0, %c0_i32 : i32
    %1 = arith.extui %0 : i1 to i32
    %c0_i32_0 = arith.constant 0 : i32
    %2 = arith.cmpi ne, %1, %c0_i32_0 : i32
    scf.if %2 {
      %cst_16 = arith.constant 0.000000e+00 : f32
      %19 = vector.broadcast %cst_16 : f32 to vector<32x1xf32>
      %c0_17 = arith.constant 0 : index
      %c0_18 = arith.constant 0 : index
      %20 = vector.load %arg4[%c0_17, %c0_18] : memref<32x1xf32, #tpu.memory_space<vmem>>, vector<32x1xf32>
      tpu.vector_store %arg4[%c0_17, %c0_18], %19 {strides = array<i32>} : memref<32x1xf32, #tpu.memory_space<vmem>>, vector<32x1xf32>,
      %cst_19 = arith.constant 0.000000e+00 : f32
      %21 = vector.broadcast %cst_19 : f32 to vector<32x1xf32>
      %c0_20 = arith.constant 0 : index
      %c0_21 = arith.constant 0 : index
      %22 = vector.load %arg5[%c0_20, %c0_21] : memref<32x1xf32, #tpu.memory_space<vmem>>, vector<32x1xf32>
      tpu.vector_store %arg5[%c0_20, %c0_21], %21 {strides = array<i32>} : memref<32x1xf32, #tpu.memory_space<vmem>>, vector<32x1xf32>,
    } else {
    }
    %c0 = arith.constant 0 : index
    %c0_1 = arith.constant 0 : index
    %3 = vector.load %arg1[%c0, %c0_1] : memref<32x256xbf16, #tpu.memory_space<vmem>>, vector<32x256xbf16>
    %c0_2 = arith.constant 0 : index
    %c0_3 = arith.constant 0 : index
    %4 = vector.load %arg2[%c0_2, %c0_3] : memref<256x32xbf16, #tpu.memory_space<vmem>>, vector<256x32xbf16>
    %cst = arith.constant dense<0.000000e+00> : vector<32x32xf32>
    %5 = tpu.matmul %3, %4, %cst {dimension_numbers = #tpu.dot_dimension_numbers<[1], [0], [0], [1], [0, 0, 1, 1], [], []>} : vector<32x256xbf16>, vector<256x32xbf16>, vector<32x32xf32> -> vector<32x32xf32>
    %6 = arith.truncf %5 : vector<32x32xf32> to vector<32x32xbf16>
    %c0_4 = arith.constant 0 : index
    %c0_5 = arith.constant 0 : index
    %7 = vector.load %arg3[%c0_4, %c0_5] : memref<32x32xbf16, #tpu.memory_space<vmem>>, vector<32x32xbf16>
    tpu.vector_store %arg3[%c0_4, %c0_5], %6 {strides = array<i32>} : memref<32x32xbf16, #tpu.memory_space<vmem>>, vector<32x32xbf16>,
    %c0_6 = arith.constant 0 : index
    %c0_7 = arith.constant 0 : index
    %8 = vector.load %arg4[%c0_6, %c0_7] : memref<32x1xf32, #tpu.memory_space<vmem>>, vector<32x1xf32>
    %cst_8 = arith.constant dense<0.000000e+00> : vector<32xf32>
    %9 = vector.multi_reduction <add>, %5, %cst_8 [1] : vector<32x32xf32> to vector<32xf32>
    %10 = vector.shape_cast %9 : vector<32xf32> to vector<32x1xf32>
    %11 = arith.addf %8, %10 : vector<32x1xf32>
    %c0_9 = arith.constant 0 : index
    %c0_10 = arith.constant 0 : index
    %12 = vector.load %arg4[%c0_9, %c0_10] : memref<32x1xf32, #tpu.memory_space<vmem>>, vector<32x1xf32>
    tpu.vector_store %arg4[%c0_9, %c0_10], %11 {strides = array<i32>} : memref<32x1xf32, #tpu.memory_space<vmem>>, vector<32x1xf32>,
    %c0_11 = arith.constant 0 : index
    %c0_12 = arith.constant 0 : index
    %13 = vector.load %arg5[%c0_11, %c0_12] : memref<32x1xf32, #tpu.memory_space<vmem>>, vector<32x1xf32>
    %14 = arith.mulf %5, %5 : vector<32x32xf32>
    %cst_13 = arith.constant dense<0.000000e+00> : vector<32xf32>
    %15 = vector.multi_reduction <add>, %14, %cst_13 [1] : vector<32x32xf32> to vector<32xf32>
    %16 = vector.shape_cast %15 : vector<32xf32> to vector<32x1xf32>
    %17 = arith.addf %13, %16 : vector<32x1xf32>
    %c0_14 = arith.constant 0 : index
    %c0_15 = arith.constant 0 : index
    %18 = vector.load %arg5[%c0_14, %c0_15] : memref<32x1xf32, #tpu.memory_space<vmem>>, vector<32x1xf32>
    tpu.vector_store %arg5[%c0_14, %c0_15], %17 {strides = array<i32>} : memref<32x1xf32, #tpu.memory_space<vmem>>, vector<32x1xf32>,
    return
  }
  func.func @transform_0(%arg0: i32) -> (i32, i32) {
    %c0_i32 = arith.constant 0 : i32
    %c0_i32_0 = arith.constant 0 : i32
    %c0_i32_1 = arith.constant 0 : i32
    return %c0_i32, %c0_i32_0 : i32, i32
  }
  func.func @transform_1(%arg0: i32) -> (i32, i32) {
    %c0_i32 = arith.constant 0 : i32
    %c0_i32_0 = arith.constant 0 : i32
    return %c0_i32, %arg0 : i32, i32
  }
  func.func @transform_2(%arg0: i32) -> (i32, i32) {
    %c0_i32 = arith.constant 0 : i32
    %c0_i32_0 = arith.constant 0 : i32
    return %c0_i32, %arg0 : i32, i32
  }
  func.func @transform_3(%arg0: i32) -> (i32, i32) {
    %c0_i32 = arith.constant 0 : i32
    %c0_i32_0 = arith.constant 0 : i32
    %c0_i32_1 = arith.constant 0 : i32
    return %c0_i32, %c0_i32_0 : i32, i32
  }
  func.func @transform_4(%arg0: i32) -> (i32, i32) {
    %c0_i32 = arith.constant 0 : i32
    %c0_i32_0 = arith.constant 0 : i32
    %c0_i32_1 = arith.constant 0 : i32
    return %c0_i32, %c0_i32_0 : i32, i32
  }
}

module attributes {stable_mosaic.version = 11 : i64} {
  func.func @_affine_relu_kernel(%arg0: i32, %arg1: memref<32x128xbf16, #tpu.memory_space<vmem>>, %arg2: memref<32x1xf32, #tpu.memory_space<vmem>>, %arg3: memref<32x1xf32, #tpu.memory_space<vmem>>, %arg4: memref<32x128xbf16, #tpu.memory_space<vmem>>) attributes {dimension_semantics = [#tpu.dimension_semantics<parallel>], iteration_bounds = array<i64: 1>, scalar_prefetch = 0 : i64, scratch_operands = 0 : i64, tpu.core_type = #tpu.core_type<tc>, window_params = [{transform_indices = @transform_0, window_bounds = array<i64: 32, 128>}, {pipeline_mode = #tpu.pipeline_mode<synchronous>, transform_indices = @transform_1, window_bounds = array<i64: 32, 1>}, {pipeline_mode = #tpu.pipeline_mode<synchronous>, transform_indices = @transform_2, window_bounds = array<i64: 32, 1>}, {transform_indices = @transform_3, window_bounds = array<i64: 32, 128>}]} {
    %c0 = arith.constant 0 : index
    %c0_0 = arith.constant 0 : index
    %0 = vector.load %arg1[%c0, %c0_0] : memref<32x128xbf16, #tpu.memory_space<vmem>>, vector<32x128xbf16>
    %1 = arith.extf %0 : vector<32x128xbf16> to vector<32x128xf32>
    %c0_1 = arith.constant 0 : index
    %c0_2 = arith.constant 0 : index
    %2 = vector.load %arg2[%c0_1, %c0_2] : memref<32x1xf32, #tpu.memory_space<vmem>>, vector<32x1xf32>
    %3 = vector.broadcast %2 : vector<32x1xf32> to vector<32x128xf32>
    %4 = arith.mulf %1, %3 : vector<32x128xf32>
    %c0_3 = arith.constant 0 : index
    %c0_4 = arith.constant 0 : index
    %5 = vector.load %arg3[%c0_3, %c0_4] : memref<32x1xf32, #tpu.memory_space<vmem>>, vector<32x1xf32>
    %6 = vector.broadcast %5 : vector<32x1xf32> to vector<32x128xf32>
    %7 = arith.addf %4, %6 : vector<32x128xf32>
    %cst = arith.constant 0.000000e+00 : f32
    %8 = vector.broadcast %cst : f32 to vector<32x128xf32>
    %9 = arith.maximumf %7, %8 : vector<32x128xf32>
    %10 = arith.truncf %9 : vector<32x128xf32> to vector<32x128xbf16>
    %c0_5 = arith.constant 0 : index
    %c0_6 = arith.constant 0 : index
    %11 = vector.load %arg4[%c0_5, %c0_6] : memref<32x128xbf16, #tpu.memory_space<vmem>>, vector<32x128xbf16>
    tpu.vector_store %arg4[%c0_5, %c0_6], %10 {strides = array<i32>} : memref<32x128xbf16, #tpu.memory_space<vmem>>, vector<32x128xbf16>,
    return
  }
  func.func @transform_0(%arg0: i32) -> (i32, i32) {
    %c0_i32 = arith.constant 0 : i32
    %c0_i32_0 = arith.constant 0 : i32
    return %c0_i32, %arg0 : i32, i32
  }
  func.func @transform_1(%arg0: i32) -> (i32, i32) {
    %c0_i32 = arith.constant 0 : i32
    %c0_i32_0 = arith.constant 0 : i32
    %c0_i32_1 = arith.constant 0 : i32
    return %c0_i32, %c0_i32_0 : i32, i32
  }
  func.func @transform_2(%arg0: i32) -> (i32, i32) {
    %c0_i32 = arith.constant 0 : i32
    %c0_i32_0 = arith.constant 0 : i32
    %c0_i32_1 = arith.constant 0 : i32
    return %c0_i32, %c0_i32_0 : i32, i32
  }
  func.func @transform_3(%arg0: i32) -> (i32, i32) {
    %c0_i32 = arith.constant 0 : i32
    %c0_i32_0 = arith.constant 0 : i32
    return %c0_i32, %arg0 : i32, i32
  }
}

module attributes {stable_mosaic.version = 11 : i64} {
  func.func @_matmul_bn_kernel(%arg0: i32, %arg1: memref<16x128xbf16, #tpu.memory_space<vmem>>, %arg2: memref<128x128xbf16, #tpu.memory_space<vmem>>, %arg3: memref<16x128xbf16, #tpu.memory_space<vmem>>, %arg4: memref<16x1xf32, #tpu.memory_space<vmem>>, %arg5: memref<16x1xf32, #tpu.memory_space<vmem>>) attributes {dimension_semantics = [#tpu.dimension_semantics<arbitrary>], iteration_bounds = array<i64: 1>, scalar_prefetch = 0 : i64, scratch_operands = 0 : i64, tpu.core_type = #tpu.core_type<tc>, window_params = [{pipeline_mode = #tpu.pipeline_mode<synchronous>, transform_indices = @transform_0, window_bounds = array<i64: 16, 128>}, {transform_indices = @transform_1, window_bounds = array<i64: 128, 128>}, {transform_indices = @transform_2, window_bounds = array<i64: 16, 128>}, {pipeline_mode = #tpu.pipeline_mode<synchronous>, transform_indices = @transform_3, window_bounds = array<i64: 16, 1>}, {pipeline_mode = #tpu.pipeline_mode<synchronous>, transform_indices = @transform_4, window_bounds = array<i64: 16, 1>}]} {
    %c0_i32 = arith.constant 0 : i32
    %0 = arith.cmpi eq, %arg0, %c0_i32 : i32
    %1 = arith.extui %0 : i1 to i32
    %c0_i32_0 = arith.constant 0 : i32
    %2 = arith.cmpi ne, %1, %c0_i32_0 : i32
    scf.if %2 {
      %cst_16 = arith.constant 0.000000e+00 : f32
      %19 = vector.broadcast %cst_16 : f32 to vector<16x1xf32>
      %c0_17 = arith.constant 0 : index
      %c0_18 = arith.constant 0 : index
      %20 = vector.load %arg4[%c0_17, %c0_18] : memref<16x1xf32, #tpu.memory_space<vmem>>, vector<16x1xf32>
      tpu.vector_store %arg4[%c0_17, %c0_18], %19 {strides = array<i32>} : memref<16x1xf32, #tpu.memory_space<vmem>>, vector<16x1xf32>,
      %cst_19 = arith.constant 0.000000e+00 : f32
      %21 = vector.broadcast %cst_19 : f32 to vector<16x1xf32>
      %c0_20 = arith.constant 0 : index
      %c0_21 = arith.constant 0 : index
      %22 = vector.load %arg5[%c0_20, %c0_21] : memref<16x1xf32, #tpu.memory_space<vmem>>, vector<16x1xf32>
      tpu.vector_store %arg5[%c0_20, %c0_21], %21 {strides = array<i32>} : memref<16x1xf32, #tpu.memory_space<vmem>>, vector<16x1xf32>,
    } else {
    }
    %c0 = arith.constant 0 : index
    %c0_1 = arith.constant 0 : index
    %3 = vector.load %arg1[%c0, %c0_1] : memref<16x128xbf16, #tpu.memory_space<vmem>>, vector<16x128xbf16>
    %c0_2 = arith.constant 0 : index
    %c0_3 = arith.constant 0 : index
    %4 = vector.load %arg2[%c0_2, %c0_3] : memref<128x128xbf16, #tpu.memory_space<vmem>>, vector<128x128xbf16>
    %cst = arith.constant dense<0.000000e+00> : vector<16x128xf32>
    %5 = tpu.matmul %3, %4, %cst {dimension_numbers = #tpu.dot_dimension_numbers<[1], [0], [0], [1], [0, 0, 1, 1], [], []>} : vector<16x128xbf16>, vector<128x128xbf16>, vector<16x128xf32> -> vector<16x128xf32>
    %6 = arith.truncf %5 : vector<16x128xf32> to vector<16x128xbf16>
    %c0_4 = arith.constant 0 : index
    %c0_5 = arith.constant 0 : index
    %7 = vector.load %arg3[%c0_4, %c0_5] : memref<16x128xbf16, #tpu.memory_space<vmem>>, vector<16x128xbf16>
    tpu.vector_store %arg3[%c0_4, %c0_5], %6 {strides = array<i32>} : memref<16x128xbf16, #tpu.memory_space<vmem>>, vector<16x128xbf16>,
    %c0_6 = arith.constant 0 : index
    %c0_7 = arith.constant 0 : index
    %8 = vector.load %arg4[%c0_6, %c0_7] : memref<16x1xf32, #tpu.memory_space<vmem>>, vector<16x1xf32>
    %cst_8 = arith.constant dense<0.000000e+00> : vector<16xf32>
    %9 = vector.multi_reduction <add>, %5, %cst_8 [1] : vector<16x128xf32> to vector<16xf32>
    %10 = vector.shape_cast %9 : vector<16xf32> to vector<16x1xf32>
    %11 = arith.addf %8, %10 : vector<16x1xf32>
    %c0_9 = arith.constant 0 : index
    %c0_10 = arith.constant 0 : index
    %12 = vector.load %arg4[%c0_9, %c0_10] : memref<16x1xf32, #tpu.memory_space<vmem>>, vector<16x1xf32>
    tpu.vector_store %arg4[%c0_9, %c0_10], %11 {strides = array<i32>} : memref<16x1xf32, #tpu.memory_space<vmem>>, vector<16x1xf32>,
    %c0_11 = arith.constant 0 : index
    %c0_12 = arith.constant 0 : index
    %13 = vector.load %arg5[%c0_11, %c0_12] : memref<16x1xf32, #tpu.memory_space<vmem>>, vector<16x1xf32>
    %14 = arith.mulf %5, %5 : vector<16x128xf32>
    %cst_13 = arith.constant dense<0.000000e+00> : vector<16xf32>
    %15 = vector.multi_reduction <add>, %14, %cst_13 [1] : vector<16x128xf32> to vector<16xf32>
    %16 = vector.shape_cast %15 : vector<16xf32> to vector<16x1xf32>
    %17 = arith.addf %13, %16 : vector<16x1xf32>
    %c0_14 = arith.constant 0 : index
    %c0_15 = arith.constant 0 : index
    %18 = vector.load %arg5[%c0_14, %c0_15] : memref<16x1xf32, #tpu.memory_space<vmem>>, vector<16x1xf32>
    tpu.vector_store %arg5[%c0_14, %c0_15], %17 {strides = array<i32>} : memref<16x1xf32, #tpu.memory_space<vmem>>, vector<16x1xf32>,
    return
  }
  func.func @transform_0(%arg0: i32) -> (i32, i32) {
    %c0_i32 = arith.constant 0 : i32
    %c0_i32_0 = arith.constant 0 : i32
    %c0_i32_1 = arith.constant 0 : i32
    return %c0_i32, %c0_i32_0 : i32, i32
  }
  func.func @transform_1(%arg0: i32) -> (i32, i32) {
    %c0_i32 = arith.constant 0 : i32
    %c0_i32_0 = arith.constant 0 : i32
    return %c0_i32, %arg0 : i32, i32
  }
  func.func @transform_2(%arg0: i32) -> (i32, i32) {
    %c0_i32 = arith.constant 0 : i32
    %c0_i32_0 = arith.constant 0 : i32
    return %c0_i32, %arg0 : i32, i32
  }
  func.func @transform_3(%arg0: i32) -> (i32, i32) {
    %c0_i32 = arith.constant 0 : i32
    %c0_i32_0 = arith.constant 0 : i32
    %c0_i32_1 = arith.constant 0 : i32
    return %c0_i32, %c0_i32_0 : i32, i32
  }
  func.func @transform_4(%arg0: i32) -> (i32, i32) {
    %c0_i32 = arith.constant 0 : i32
    %c0_i32_0 = arith.constant 0 : i32
    %c0_i32_1 = arith.constant 0 : i32
    return %c0_i32, %c0_i32_0 : i32, i32
  }
}

module attributes {stable_mosaic.version = 11 : i64} {
  func.func @_affine_relu_kernel(%arg0: i32, %arg1: memref<16x512xbf16, #tpu.memory_space<vmem>>, %arg2: memref<16x1xf32, #tpu.memory_space<vmem>>, %arg3: memref<16x1xf32, #tpu.memory_space<vmem>>, %arg4: memref<16x512xbf16, #tpu.memory_space<vmem>>) attributes {dimension_semantics = [#tpu.dimension_semantics<parallel>], iteration_bounds = array<i64: 1>, scalar_prefetch = 0 : i64, scratch_operands = 0 : i64, tpu.core_type = #tpu.core_type<tc>, window_params = [{transform_indices = @transform_0, window_bounds = array<i64: 16, 512>}, {pipeline_mode = #tpu.pipeline_mode<synchronous>, transform_indices = @transform_1, window_bounds = array<i64: 16, 1>}, {pipeline_mode = #tpu.pipeline_mode<synchronous>, transform_indices = @transform_2, window_bounds = array<i64: 16, 1>}, {transform_indices = @transform_3, window_bounds = array<i64: 16, 512>}]} {
    %c0 = arith.constant 0 : index
    %c0_0 = arith.constant 0 : index
    %0 = vector.load %arg1[%c0, %c0_0] : memref<16x512xbf16, #tpu.memory_space<vmem>>, vector<16x512xbf16>
    %1 = arith.extf %0 : vector<16x512xbf16> to vector<16x512xf32>
    %c0_1 = arith.constant 0 : index
    %c0_2 = arith.constant 0 : index
    %2 = vector.load %arg2[%c0_1, %c0_2] : memref<16x1xf32, #tpu.memory_space<vmem>>, vector<16x1xf32>
    %3 = vector.broadcast %2 : vector<16x1xf32> to vector<16x512xf32>
    %4 = arith.mulf %1, %3 : vector<16x512xf32>
    %c0_3 = arith.constant 0 : index
    %c0_4 = arith.constant 0 : index
    %5 = vector.load %arg3[%c0_3, %c0_4] : memref<16x1xf32, #tpu.memory_space<vmem>>, vector<16x1xf32>
    %6 = vector.broadcast %5 : vector<16x1xf32> to vector<16x512xf32>
    %7 = arith.addf %4, %6 : vector<16x512xf32>
    %cst = arith.constant 0.000000e+00 : f32
    %8 = vector.broadcast %cst : f32 to vector<16x512xf32>
    %9 = arith.maximumf %7, %8 : vector<16x512xf32>
    %10 = arith.truncf %9 : vector<16x512xf32> to vector<16x512xbf16>
    %c0_5 = arith.constant 0 : index
    %c0_6 = arith.constant 0 : index
    %11 = vector.load %arg4[%c0_5, %c0_6] : memref<16x512xbf16, #tpu.memory_space<vmem>>, vector<16x512xbf16>
    tpu.vector_store %arg4[%c0_5, %c0_6], %10 {strides = array<i32>} : memref<16x512xbf16, #tpu.memory_space<vmem>>, vector<16x512xbf16>,
    return
  }
  func.func @transform_0(%arg0: i32) -> (i32, i32) {
    %c0_i32 = arith.constant 0 : i32
    %c0_i32_0 = arith.constant 0 : i32
    return %c0_i32, %arg0 : i32, i32
  }
  func.func @transform_1(%arg0: i32) -> (i32, i32) {
    %c0_i32 = arith.constant 0 : i32
    %c0_i32_0 = arith.constant 0 : i32
    %c0_i32_1 = arith.constant 0 : i32
    return %c0_i32, %c0_i32_0 : i32, i32
  }
  func.func @transform_2(%arg0: i32) -> (i32, i32) {
    %c0_i32 = arith.constant 0 : i32
    %c0_i32_0 = arith.constant 0 : i32
    %c0_i32_1 = arith.constant 0 : i32
    return %c0_i32, %c0_i32_0 : i32, i32
  }
  func.func @transform_3(%arg0: i32) -> (i32, i32) {
    %c0_i32 = arith.constant 0 : i32
    %c0_i32_0 = arith.constant 0 : i32
    return %c0_i32, %arg0 : i32, i32
  }
}

module attributes {stable_mosaic.version = 11 : i64} {
  func.func @_matmul_bn_kernel(%arg0: i32, %arg1: memref<8x64xbf16, #tpu.memory_space<vmem>>, %arg2: memref<64x512xbf16, #tpu.memory_space<vmem>>, %arg3: memref<8x512xbf16, #tpu.memory_space<vmem>>, %arg4: memref<8x1xf32, #tpu.memory_space<vmem>>, %arg5: memref<8x1xf32, #tpu.memory_space<vmem>>) attributes {dimension_semantics = [#tpu.dimension_semantics<arbitrary>], iteration_bounds = array<i64: 1>, scalar_prefetch = 0 : i64, scratch_operands = 0 : i64, tpu.core_type = #tpu.core_type<tc>, window_params = [{pipeline_mode = #tpu.pipeline_mode<synchronous>, transform_indices = @transform_0, window_bounds = array<i64: 8, 64>}, {transform_indices = @transform_1, window_bounds = array<i64: 64, 512>}, {transform_indices = @transform_2, window_bounds = array<i64: 8, 512>}, {pipeline_mode = #tpu.pipeline_mode<synchronous>, transform_indices = @transform_3, window_bounds = array<i64: 8, 1>}, {pipeline_mode = #tpu.pipeline_mode<synchronous>, transform_indices = @transform_4, window_bounds = array<i64: 8, 1>}]} {
    %c0_i32 = arith.constant 0 : i32
    %0 = arith.cmpi eq, %arg0, %c0_i32 : i32
    %1 = arith.extui %0 : i1 to i32
    %c0_i32_0 = arith.constant 0 : i32
    %2 = arith.cmpi ne, %1, %c0_i32_0 : i32
    scf.if %2 {
      %cst_16 = arith.constant 0.000000e+00 : f32
      %19 = vector.broadcast %cst_16 : f32 to vector<8x1xf32>
      %c0_17 = arith.constant 0 : index
      %c0_18 = arith.constant 0 : index
      %20 = vector.load %arg4[%c0_17, %c0_18] : memref<8x1xf32, #tpu.memory_space<vmem>>, vector<8x1xf32>
      tpu.vector_store %arg4[%c0_17, %c0_18], %19 {strides = array<i32>} : memref<8x1xf32, #tpu.memory_space<vmem>>, vector<8x1xf32>,
      %cst_19 = arith.constant 0.000000e+00 : f32
      %21 = vector.broadcast %cst_19 : f32 to vector<8x1xf32>
      %c0_20 = arith.constant 0 : index
      %c0_21 = arith.constant 0 : index
      %22 = vector.load %arg5[%c0_20, %c0_21] : memref<8x1xf32, #tpu.memory_space<vmem>>, vector<8x1xf32>
      tpu.vector_store %arg5[%c0_20, %c0_21], %21 {strides = array<i32>} : memref<8x1xf32, #tpu.memory_space<vmem>>, vector<8x1xf32>,
    } else {
    }
    %c0 = arith.constant 0 : index
    %c0_1 = arith.constant 0 : index
    %3 = vector.load %arg1[%c0, %c0_1] : memref<8x64xbf16, #tpu.memory_space<vmem>>, vector<8x64xbf16>
    %c0_2 = arith.constant 0 : index
    %c0_3 = arith.constant 0 : index
    %4 = vector.load %arg2[%c0_2, %c0_3] : memref<64x512xbf16, #tpu.memory_space<vmem>>, vector<64x512xbf16>
    %cst = arith.constant dense<0.000000e+00> : vector<8x512xf32>
    %5 = tpu.matmul %3, %4, %cst {dimension_numbers = #tpu.dot_dimension_numbers<[1], [0], [0], [1], [0, 0, 1, 1], [], []>} : vector<8x64xbf16>, vector<64x512xbf16>, vector<8x512xf32> -> vector<8x512xf32>
    %6 = arith.truncf %5 : vector<8x512xf32> to vector<8x512xbf16>
    %c0_4 = arith.constant 0 : index
    %c0_5 = arith.constant 0 : index
    %7 = vector.load %arg3[%c0_4, %c0_5] : memref<8x512xbf16, #tpu.memory_space<vmem>>, vector<8x512xbf16>
    tpu.vector_store %arg3[%c0_4, %c0_5], %6 {strides = array<i32>} : memref<8x512xbf16, #tpu.memory_space<vmem>>, vector<8x512xbf16>,
    %c0_6 = arith.constant 0 : index
    %c0_7 = arith.constant 0 : index
    %8 = vector.load %arg4[%c0_6, %c0_7] : memref<8x1xf32, #tpu.memory_space<vmem>>, vector<8x1xf32>
    %cst_8 = arith.constant dense<0.000000e+00> : vector<8xf32>
    %9 = vector.multi_reduction <add>, %5, %cst_8 [1] : vector<8x512xf32> to vector<8xf32>
    %10 = vector.shape_cast %9 : vector<8xf32> to vector<8x1xf32>
    %11 = arith.addf %8, %10 : vector<8x1xf32>
    %c0_9 = arith.constant 0 : index
    %c0_10 = arith.constant 0 : index
    %12 = vector.load %arg4[%c0_9, %c0_10] : memref<8x1xf32, #tpu.memory_space<vmem>>, vector<8x1xf32>
    tpu.vector_store %arg4[%c0_9, %c0_10], %11 {strides = array<i32>} : memref<8x1xf32, #tpu.memory_space<vmem>>, vector<8x1xf32>,
    %c0_11 = arith.constant 0 : index
    %c0_12 = arith.constant 0 : index
    %13 = vector.load %arg5[%c0_11, %c0_12] : memref<8x1xf32, #tpu.memory_space<vmem>>, vector<8x1xf32>
    %14 = arith.mulf %5, %5 : vector<8x512xf32>
    %cst_13 = arith.constant dense<0.000000e+00> : vector<8xf32>
    %15 = vector.multi_reduction <add>, %14, %cst_13 [1] : vector<8x512xf32> to vector<8xf32>
    %16 = vector.shape_cast %15 : vector<8xf32> to vector<8x1xf32>
    %17 = arith.addf %13, %16 : vector<8x1xf32>
    %c0_14 = arith.constant 0 : index
    %c0_15 = arith.constant 0 : index
    %18 = vector.load %arg5[%c0_14, %c0_15] : memref<8x1xf32, #tpu.memory_space<vmem>>, vector<8x1xf32>
    tpu.vector_store %arg5[%c0_14, %c0_15], %17 {strides = array<i32>} : memref<8x1xf32, #tpu.memory_space<vmem>>, vector<8x1xf32>,
    return
  }
  func.func @transform_0(%arg0: i32) -> (i32, i32) {
    %c0_i32 = arith.constant 0 : i32
    %c0_i32_0 = arith.constant 0 : i32
    %c0_i32_1 = arith.constant 0 : i32
    return %c0_i32, %c0_i32_0 : i32, i32
  }
  func.func @transform_1(%arg0: i32) -> (i32, i32) {
    %c0_i32 = arith.constant 0 : i32
    %c0_i32_0 = arith.constant 0 : i32
    return %c0_i32, %arg0 : i32, i32
  }
  func.func @transform_2(%arg0: i32) -> (i32, i32) {
    %c0_i32 = arith.constant 0 : i32
    %c0_i32_0 = arith.constant 0 : i32
    return %c0_i32, %arg0 : i32, i32
  }
  func.func @transform_3(%arg0: i32) -> (i32, i32) {
    %c0_i32 = arith.constant 0 : i32
    %c0_i32_0 = arith.constant 0 : i32
    %c0_i32_1 = arith.constant 0 : i32
    return %c0_i32, %c0_i32_0 : i32, i32
  }
  func.func @transform_4(%arg0: i32) -> (i32, i32) {
    %c0_i32 = arith.constant 0 : i32
    %c0_i32_0 = arith.constant 0 : i32
    %c0_i32_1 = arith.constant 0 : i32
    return %c0_i32, %c0_i32_0 : i32, i32
  }
}

module attributes {stable_mosaic.version = 11 : i64} {
  func.func @_affine_relu_kernel(%arg0: i32, %arg1: memref<8x2048xbf16, #tpu.memory_space<vmem>>, %arg2: memref<8x1xf32, #tpu.memory_space<vmem>>, %arg3: memref<8x1xf32, #tpu.memory_space<vmem>>, %arg4: memref<8x2048xbf16, #tpu.memory_space<vmem>>) attributes {dimension_semantics = [#tpu.dimension_semantics<parallel>], iteration_bounds = array<i64: 1>, scalar_prefetch = 0 : i64, scratch_operands = 0 : i64, tpu.core_type = #tpu.core_type<tc>, window_params = [{transform_indices = @transform_0, window_bounds = array<i64: 8, 2048>}, {pipeline_mode = #tpu.pipeline_mode<synchronous>, transform_indices = @transform_1, window_bounds = array<i64: 8, 1>}, {pipeline_mode = #tpu.pipeline_mode<synchronous>, transform_indices = @transform_2, window_bounds = array<i64: 8, 1>}, {transform_indices = @transform_3, window_bounds = array<i64: 8, 2048>}]} {
    %c0 = arith.constant 0 : index
    %c0_0 = arith.constant 0 : index
    %0 = vector.load %arg1[%c0, %c0_0] : memref<8x2048xbf16, #tpu.memory_space<vmem>>, vector<8x2048xbf16>
    %1 = arith.extf %0 : vector<8x2048xbf16> to vector<8x2048xf32>
    %c0_1 = arith.constant 0 : index
    %c0_2 = arith.constant 0 : index
    %2 = vector.load %arg2[%c0_1, %c0_2] : memref<8x1xf32, #tpu.memory_space<vmem>>, vector<8x1xf32>
    %3 = vector.broadcast %2 : vector<8x1xf32> to vector<8x2048xf32>
    %4 = arith.mulf %1, %3 : vector<8x2048xf32>
    %c0_3 = arith.constant 0 : index
    %c0_4 = arith.constant 0 : index
    %5 = vector.load %arg3[%c0_3, %c0_4] : memref<8x1xf32, #tpu.memory_space<vmem>>, vector<8x1xf32>
    %6 = vector.broadcast %5 : vector<8x1xf32> to vector<8x2048xf32>
    %7 = arith.addf %4, %6 : vector<8x2048xf32>
    %cst = arith.constant 0.000000e+00 : f32
    %8 = vector.broadcast %cst : f32 to vector<8x2048xf32>
    %9 = arith.maximumf %7, %8 : vector<8x2048xf32>
    %10 = arith.truncf %9 : vector<8x2048xf32> to vector<8x2048xbf16>
    %c0_5 = arith.constant 0 : index
    %c0_6 = arith.constant 0 : index
    %11 = vector.load %arg4[%c0_5, %c0_6] : memref<8x2048xbf16, #tpu.memory_space<vmem>>, vector<8x2048xbf16>
    tpu.vector_store %arg4[%c0_5, %c0_6], %10 {strides = array<i32>} : memref<8x2048xbf16, #tpu.memory_space<vmem>>, vector<8x2048xbf16>,
    return
  }
  func.func @transform_0(%arg0: i32) -> (i32, i32) {
    %c0_i32 = arith.constant 0 : i32
    %c0_i32_0 = arith.constant 0 : i32
    return %c0_i32, %arg0 : i32, i32
  }
  func.func @transform_1(%arg0: i32) -> (i32, i32) {
    %c0_i32 = arith.constant 0 : i32
    %c0_i32_0 = arith.constant 0 : i32
    %c0_i32_1 = arith.constant 0 : i32
    return %c0_i32, %c0_i32_0 : i32, i32
  }
  func.func @transform_2(%arg0: i32) -> (i32, i32) {
    %c0_i32 = arith.constant 0 : i32
    %c0_i32_0 = arith.constant 0 : i32
    %c0_i32_1 = arith.constant 0 : i32
    return %c0_i32, %c0_i32_0 : i32, i32
  }
  func.func @transform_3(%arg0: i32) -> (i32, i32) {
    %c0_i32 = arith.constant 0 : i32
    %c0_i32_0 = arith.constant 0 : i32
    return %c0_i32, %arg0 : i32, i32
  }
}

module attributes {stable_mosaic.version = 11 : i64} {
  func.func @_matmul_tanh_kernel(%arg0: i32, %arg1: memref<3x32xbf16, #tpu.memory_space<vmem>>, %arg2: memref<32x2048xbf16, #tpu.memory_space<vmem>>, %arg3: memref<3x2048xf32, #tpu.memory_space<vmem>>) attributes {dimension_semantics = [#tpu.dimension_semantics<parallel>], iteration_bounds = array<i64: 1>, scalar_prefetch = 0 : i64, scratch_operands = 0 : i64, tpu.core_type = #tpu.core_type<tc>, window_params = [{pipeline_mode = #tpu.pipeline_mode<synchronous>, transform_indices = @transform_0, window_bounds = array<i64: 3, 32>}, {transform_indices = @transform_1, window_bounds = array<i64: 32, 2048>}, {transform_indices = @transform_2, window_bounds = array<i64: 3, 2048>}]} {
    %c0 = arith.constant 0 : index
    %c0_0 = arith.constant 0 : index
    %0 = vector.load %arg1[%c0, %c0_0] : memref<3x32xbf16, #tpu.memory_space<vmem>>, vector<3x32xbf16>
    %c0_1 = arith.constant 0 : index
    %c0_2 = arith.constant 0 : index
    %1 = vector.load %arg2[%c0_1, %c0_2] : memref<32x2048xbf16, #tpu.memory_space<vmem>>, vector<32x2048xbf16>
    %cst = arith.constant dense<0.000000e+00> : vector<3x2048xf32>
    %2 = tpu.matmul %0, %1, %cst {dimension_numbers = #tpu.dot_dimension_numbers<[1], [0], [0], [1], [0, 0, 1, 1], [], []>} : vector<3x32xbf16>, vector<32x2048xbf16>, vector<3x2048xf32> -> vector<3x2048xf32>
    %3 = math.tanh %2 : vector<3x2048xf32>
    %c0_3 = arith.constant 0 : index
    %c0_4 = arith.constant 0 : index
    %4 = vector.load %arg3[%c0_3, %c0_4] : memref<3x2048xf32, #tpu.memory_space<vmem>>, vector<3x2048xf32>
    tpu.vector_store %arg3[%c0_3, %c0_4], %3 {strides = array<i32>} : memref<3x2048xf32, #tpu.memory_space<vmem>>, vector<3x2048xf32>,
    return
  }
  func.func @transform_0(%arg0: i32) -> (i32, i32) {
    %c0_i32 = arith.constant 0 : i32
    %c0_i32_0 = arith.constant 0 : i32
    %c0_i32_1 = arith.constant 0 : i32
    return %c0_i32, %c0_i32_0 : i32, i32
  }
  func.func @transform_1(%arg0: i32) -> (i32, i32) {
    %c0_i32 = arith.constant 0 : i32
    %c0_i32_0 = arith.constant 0 : i32
    return %c0_i32, %arg0 : i32, i32
  }
  func.func @transform_2(%arg0: i32) -> (i32, i32) {
    %c0_i32 = arith.constant 0 : i32
    %c0_i32_0 = arith.constant 0 : i32
    return %c0_i32, %arg0 : i32, i32
  }
}

</mosaic_0001>

<llo_original>
// kernel: generator_forward.22
$region0: #{generator_forward.22}
  #allocation0 [shape = 'u32[]', space=smem, size = 0x4, offset = 0x4, fixed_abs, tag = 'smem constant byte address 0x4 - core index']
  #allocation1 [shape = 'u32[144,128]{1,0:T(1,128)}', space=vmem, size = 0x12000, scoped, tag = 'internal scratch']
  %s0 = inlined_call_operand.vmem [shape: bf16[64,32], index: 0, kind: input, shape index: {}]
  %s1 = inlined_call_operand.vmem [shape: f32[64,1], index: 1, kind: input, shape index: {}]
  %s2 = inlined_call_operand.vmem [shape: f32[64,1], index: 2, kind: input, shape index: {}]
  %s3 = inlined_call_operand.vmem [shape: bf16[64,32], index: 3, kind: output, shape index: {}]
  %s4 = sld [smem:[#allocation0]]
  $region22: #{generator_forward.22} parent=0
    _
  %s6 = ssub.s32 1, %s4
  %s7 = scalar_select 0, %s6, %s4
  // Predicated region
  $region2: #{generator_forward.22} parent=0 // pred_check
    _
  $region3: #{generator_forward.22} parent=0 // pred_check_branch
    %9 = sbr.rel (0) target = $region5
  $region4: #{generator_forward.22} parent=0 // pred_region
    _
  $region5: #{generator_forward.22} parent=0 // pred_fallthru
    _
  // Predicated region
  $region6: #{generator_forward.22} parent=0 // pred_check
    _
  $region7: #{generator_forward.22} parent=0 // pred_check_branch
    %11 = sbr.rel (0) target = $region9
  $region8: #{generator_forward.22} parent=0 // pred_region
    _
  $region9: #{generator_forward.22} parent=0 // pred_fallthru
    _
  // Predicated region
  $region10: #{generator_forward.22} parent=0 // pred_check
    _
  $region11: #{generator_forward.22} parent=0 // pred_check_branch
    %13 = sbr.rel (0) target = $region13
  $region12: #{generator_forward.22} parent=0 // pred_region
    _
  $region13: #{generator_forward.22} parent=0 // pred_fallthru
    _
  %v14 = vld [vmem:[%s0] sm:$0xf]
  %v15 = vld [vmem:[%s0 + $0x4] sm:$0xf]
  %v16 = vld [vmem:[%s0 + $0x8] sm:$0xf]
  %v17 = vld [vmem:[%s0 + $0xc] sm:$0xf]
  %v18 = vld [vmem:[%s0 + $0x10] sm:$0xf]
  %v19 = vld [vmem:[%s0 + $0x14] sm:$0xf]
  %v20 = vld [vmem:[%s0 + $0x18] sm:$0xf]
  %v21 = vld [vmem:[%s0 + $0x1c] sm:$0xf]
  %v22 = vunpack.c.l.bf16 %v14
  %v23 = vunpack.c.l.bf16 %v15
  %v24 = vunpack.c.l.bf16 %v16
  %v25 = vunpack.c.l.bf16 %v17
  %v26 = vunpack.c.l.bf16 %v18
  %v27 = vunpack.c.l.bf16 %v19
  %v28 = vunpack.c.l.bf16 %v20
  %v29 = vunpack.c.l.bf16 %v21
  %v30 = vld [vmem:[%s1] sm:$0xff]
  %v31 = vld [vmem:[%s1 + $0x8] sm:$0xff]
  %v32 = vld [vmem:[%s1 + $0x10] sm:$0xff]
  %v33 = vld [vmem:[%s1 + $0x18] sm:$0xff]
  %v34 = vld [vmem:[%s1 + $0x20] sm:$0xff]
  %v35 = vld [vmem:[%s1 + $0x28] sm:$0xff]
  %v36 = vld [vmem:[%s1 + $0x30] sm:$0xff]
  %v37 = vld [vmem:[%s1 + $0x38] sm:$0xff]
  %39 = vset.pattern.permute.xlu0 0
  %40 = vperm.xlu0 %39, %v30
  %v41 = vpop.permute.xlu0 %40
  %44 = vset.pattern.permute.xlu0 0
  %45 = vperm.xlu0 %44, %v31
  %v46 = vpop.permute.xlu0 %45
  %49 = vset.pattern.permute.xlu0 0
  %50 = vperm.xlu0 %49, %v32
  %v51 = vpop.permute.xlu0 %50
  %54 = vset.pattern.permute.xlu0 0
  %55 = vperm.xlu0 %54, %v33
  %v56 = vpop.permute.xlu0 %55
  %59 = vset.pattern.permute.xlu0 0
  %60 = vperm.xlu0 %59, %v34
  %v61 = vpop.permute.xlu0 %60
  %64 = vset.pattern.permute.xlu0 0
  %65 = vperm.xlu0 %64, %v35
  %v66 = vpop.permute.xlu0 %65
  %69 = vset.pattern.permute.xlu0 0
  %70 = vperm.xlu0 %69, %v36
  %v71 = vpop.permute.xlu0 %70
  %74 = vset.pattern.permute.xlu0 0
  %75 = vperm.xlu0 %74, %v37
  %v76 = vpop.permute.xlu0 %75
  %v78 = vmul.f32 %v22, %v41
  %v79 = vmul.f32 %v23, %v46
  %v80 = vmul.f32 %v24, %v51
  %v81 = vmul.f32 %v25, %v56
  %v82 = vmul.f32 %v26, %v61
  %v83 = vmul.f32 %v27, %v66
  %v84 = vmul.f32 %v28, %v71
  %v85 = vmul.f32 %v29, %v76
  %v86 = vld [vmem:[%s2] sm:$0xff]
  %v87 = vld [vmem:[%s2 + $0x8] sm:$0xff]
  %v88 = vld [vmem:[%s2 + $0x10] sm:$0xff]
  %v89 = vld [vmem:[%s2 + $0x18] sm:$0xff]
  %v90 = vld [vmem:[%s2 + $0x20] sm:$0xff]
  %v91 = vld [vmem:[%s2 + $0x28] sm:$0xff]
  %v92 = vld [vmem:[%s2 + $0x30] sm:$0xff]
  %v93 = vld [vmem:[%s2 + $0x38] sm:$0xff]
  %95 = vset.pattern.permute.xlu0 0
  %96 = vperm.xlu0 %95, %v86
  %v97 = vpop.permute.xlu0 %96
  %100 = vset.pattern.permute.xlu0 0
  %101 = vperm.xlu0 %100, %v87
  %v102 = vpop.permute.xlu0 %101
  %105 = vset.pattern.permute.xlu0 0
  %106 = vperm.xlu0 %105, %v88
  %v107 = vpop.permute.xlu0 %106
  %110 = vset.pattern.permute.xlu0 0
  %111 = vperm.xlu0 %110, %v89
  %v112 = vpop.permute.xlu0 %111
  %115 = vset.pattern.permute.xlu0 0
  %116 = vperm.xlu0 %115, %v90
  %v117 = vpop.permute.xlu0 %116
  %120 = vset.pattern.permute.xlu0 0
  %121 = vperm.xlu0 %120, %v91
  %v122 = vpop.permute.xlu0 %121
  %125 = vset.pattern.permute.xlu0 0
  %126 = vperm.xlu0 %125, %v92
  %v127 = vpop.permute.xlu0 %126
  %130 = vset.pattern.permute.xlu0 0
  %131 = vperm.xlu0 %130, %v93
  %v132 = vpop.permute.xlu0 %131
  %v134 = vadd.f32 %v78, %v97
  %v135 = vadd.f32 %v79, %v102
  %v136 = vadd.f32 %v80, %v107
  %v137 = vadd.f32 %v81, %v112
  %v138 = vadd.f32 %v82, %v117
  %v139 = vadd.f32 %v83, %v122
  %v140 = vadd.f32 %v84, %v127
  %v141 = vadd.f32 %v85, %v132
  %v142 = vmax.f32 %v134, 0.0
  %v143 = vmax.f32 %v135, 0.0
  %v144 = vmax.f32 %v136, 0.0
  %v145 = vmax.f32 %v137, 0.0
  %v146 = vmax.f32 %v138, 0.0
  %v147 = vmax.f32 %v139, 0.0
  %v148 = vmax.f32 %v140, 0.0
  %v149 = vmax.f32 %v141, 0.0
  %v150 = vpack.c.bf16 %v143, %v142
  %v151 = vpack.c.bf16 %v145, %v144
  %v152 = vpack.c.bf16 %v147, %v146
  %v153 = vpack.c.bf16 %v149, %v148
  %v158 = vunpack.c.l.b16 %v150
  %v159 = vunpack.c.h.b16 %v150
  %v160 = vunpack.c.l.b16 %v151
  %v161 = vunpack.c.h.b16 %v151
  %v162 = vunpack.c.l.b16 %v152
  %v163 = vunpack.c.h.b16 %v152
  %v164 = vunpack.c.l.b16 %v153
  %v165 = vunpack.c.h.b16 %v153
  %v166 = vpack.c.b16 %v158, %v158
  %v167 = vpack.c.b16 %v159, %v159
  %v168 = vpack.c.b16 %v160, %v160
  %v169 = vpack.c.b16 %v161, %v161
  %v170 = vpack.c.b16 %v162, %v162
  %v171 = vpack.c.b16 %v163, %v163
  %v172 = vpack.c.b16 %v164, %v164
  %v173 = vpack.c.b16 %v165, %v165
  %vm182 = vcmask 257024
  %183 = vst.msk [vmem:[%s3] sm:$0xf] %vm182, %v166
  %184 = vst.msk [vmem:[%s3 + $0x4] sm:$0xf] %vm182, %v167
  %185 = vst.msk [vmem:[%s3 + $0x8] sm:$0xf] %vm182, %v168
  %186 = vst.msk [vmem:[%s3 + $0xc] sm:$0xf] %vm182, %v169
  %187 = vst.msk [vmem:[%s3 + $0x10] sm:$0xf] %vm182, %v170
  %188 = vst.msk [vmem:[%s3 + $0x14] sm:$0xf] %vm182, %v171
  %189 = vst.msk [vmem:[%s3 + $0x18] sm:$0xf] %vm182, %v172
  %190 = vst.msk [vmem:[%s3 + $0x1c] sm:$0xf] %vm182, %v173
  // Predicated region
  $region14: #{generator_forward.22} parent=0 // pred_check
    _
  $region15: #{generator_forward.22} parent=0 // pred_check_branch
    %192 = sbr.rel (0) target = $region17
  $region16: #{generator_forward.22} parent=0 // pred_region
    _
  $region17: #{generator_forward.22} parent=0 // pred_fallthru
    _
  // Predicated region
  $region18: #{generator_forward.22} parent=0 // pred_check
    _
  $region19: #{generator_forward.22} parent=0 // pred_check_branch
    %194 = sbr.rel (0) target = $region21
  $region20: #{generator_forward.22} parent=0 // pred_region
    _
  $region21: #{generator_forward.22} parent=0 // pred_fallthru
    _

// kernel: generator_forward.21
$region0: #{generator_forward.21}
  #allocation0 [shape = 'u32[]', space=smem, size = 0x4, offset = 0x4, fixed_abs, tag = 'smem constant byte address 0x4 - core index']
  #allocation1 [shape = 'u32[144,128]{1,0:T(1,128)}', space=vmem, size = 0x12000, scoped, tag = 'internal scratch']
  %s0 = inlined_call_operand.vmem [shape: bf16[64,256], index: 0, kind: input, shape index: {}]
  %s1 = inlined_call_operand.vmem [shape: bf16[256,32], index: 1, kind: input, shape index: {}]
  %s2 = inlined_call_operand.vmem [shape: bf16[64,32], index: 2, kind: output, shape index: {0}]
  %s3 = inlined_call_operand.vmem [shape: f32[64,1], index: 3, kind: output, shape index: {1}]
  %s4 = inlined_call_operand.vmem [shape: f32[64,1], index: 4, kind: output, shape index: {2}]
  %5 = xla_tuple %s2, %s3, %s4
  %s6 = sld [smem:[#allocation0]]
  $region38: #{generator_forward.21} parent=0
    _
  %s8 = ssub.s32 1, %s6
  %s9 = scalar_select 0, %s8, %s6
  // Predicated region
  $region2: #{generator_forward.21} parent=0 // pred_check
    _
  $region3: #{generator_forward.21} parent=0 // pred_check_branch
    %11 = sbr.rel (0) target = $region5
  $region4: #{generator_forward.21} parent=0 // pred_region
    _
  $region5: #{generator_forward.21} parent=0 // pred_fallthru
    _
  // Predicated region
  $region6: #{generator_forward.21} parent=0 // pred_check
    _
  $region7: #{generator_forward.21} parent=0 // pred_check_branch
    %13 = sbr.rel (0) target = $region9
  $region8: #{generator_forward.21} parent=0 // pred_region
    _
  $region9: #{generator_forward.21} parent=0 // pred_fallthru
    _
  %p15 = scmp.eq.s32.totalorder 0, 0
  // Predicated region
  $region10: #{generator_forward.21} parent=0 // pred_check
    %p16 = pneg %p15
  $region11: #{generator_forward.21} parent=0 // pred_check_branch
    %18 = sbr.rel (%p16) target = $region13
  $region12: #{generator_forward.21} parent=0 // pred_region
    %vm19 = vcmask 7168
    %20 = vst.msk [vmem:[%s3] sm:$0xff] %vm19, 0.0
    %21 = vst.msk [vmem:[%s3 + $0x8] sm:$0xff] %vm19, 0.0
    %22 = vst.msk [vmem:[%s3 + $0x10] sm:$0xff] %vm19, 0.0
    %23 = vst.msk [vmem:[%s3 + $0x18] sm:$0xff] %vm19, 0.0
    %24 = vst.msk [vmem:[%s3 + $0x20] sm:$0xff] %vm19, 0.0
    %25 = vst.msk [vmem:[%s3 + $0x28] sm:$0xff] %vm19, 0.0
    %26 = vst.msk [vmem:[%s3 + $0x30] sm:$0xff] %vm19, 0.0
    %27 = vst.msk [vmem:[%s3 + $0x38] sm:$0xff] %vm19, 0.0
    %28 = vst.msk [vmem:[%s4] sm:$0xff] %vm19, 0.0
    %29 = vst.msk [vmem:[%s4 + $0x8] sm:$0xff] %vm19, 0.0
    %30 = vst.msk [vmem:[%s4 + $0x10] sm:$0xff] %vm19, 0.0
    %31 = vst.msk [vmem:[%s4 + $0x18] sm:$0xff] %vm19, 0.0
    %32 = vst.msk [vmem:[%s4 + $0x20] sm:$0xff] %vm19, 0.0
    %33 = vst.msk [vmem:[%s4 + $0x28] sm:$0xff] %vm19, 0.0
    %34 = vst.msk [vmem:[%s4 + $0x30] sm:$0xff] %vm19, 0.0
    %35 = vst.msk [vmem:[%s4 + $0x38] sm:$0xff] %vm19, 0.0
  $region13: #{generator_forward.21} parent=0 // pred_fallthru
    _
  %v36 = vld [vmem:[%s0] sm:$0xff]
  %v37 = vld [vmem:[%s0 + $0x8] sm:$0xff]
  %v38 = vld [vmem:[%s0 + $0x10] sm:$0xff]
  %v39 = vld [vmem:[%s0 + $0x18] sm:$0xff]
  %v40 = vld [vmem:[%s0 + $0x20] sm:$0xff]
  %v41 = vld [vmem:[%s0 + $0x28] sm:$0xff]
  %v42 = vld [vmem:[%s0 + $0x30] sm:$0xff]
  %v43 = vld [vmem:[%s0 + $0x38] sm:$0xff]
  %v44 = vld [vmem:[%s1] sm:$0xf]
  %v45 = vld [vmem:[%s1 + $0x4] sm:$0xf]
  %v46 = vld [vmem:[%s1 + $0x8] sm:$0xf]
  %v47 = vld [vmem:[%s1 + $0xc] sm:$0xf]
  %v48 = vld [vmem:[%s1 + $0x10] sm:$0xf]
  %v49 = vld [vmem:[%s1 + $0x14] sm:$0xf]
  %v50 = vld [vmem:[%s1 + $0x18] sm:$0xf]
  %v51 = vld [vmem:[%s1 + $0x1c] sm:$0xf]
  %v52 = vld [vmem:[%s1 + $0x20] sm:$0xf]
  %v53 = vld [vmem:[%s1 + $0x24] sm:$0xf]
  %v54 = vld [vmem:[%s1 + $0x28] sm:$0xf]
  %v55 = vld [vmem:[%s1 + $0x2c] sm:$0xf]
  %v56 = vld [vmem:[%s1 + $0x30] sm:$0xf]
  %v57 = vld [vmem:[%s1 + $0x34] sm:$0xf]
  %v58 = vld [vmem:[%s1 + $0x38] sm:$0xf]
  %v59 = vld [vmem:[%s1 + $0x3c] sm:$0xf]
  %v60 = vld [vmem:[%s1 + $0x40] sm:$0xf]
  %v61 = vld [vmem:[%s1 + $0x44] sm:$0xf]
  %v62 = vld [vmem:[%s1 + $0x48] sm:$0xf]
  %v63 = vld [vmem:[%s1 + $0x4c] sm:$0xf]
  %v64 = vld [vmem:[%s1 + $0x50] sm:$0xf]
  %v65 = vld [vmem:[%s1 + $0x54] sm:$0xf]
  %v66 = vld [vmem:[%s1 + $0x58] sm:$0xf]
  %v67 = vld [vmem:[%s1 + $0x5c] sm:$0xf]
  %v68 = vld [vmem:[%s1 + $0x60] sm:$0xf]
  %v69 = vld [vmem:[%s1 + $0x64] sm:$0xf]
  %v70 = vld [vmem:[%s1 + $0x68] sm:$0xf]
  %v71 = vld [vmem:[%s1 + $0x6c] sm:$0xf]
  %v72 = vld [vmem:[%s1 + $0x70] sm:$0xf]
  %v73 = vld [vmem:[%s1 + $0x74] sm:$0xf]
  %v74 = vld [vmem:[%s1 + $0x78] sm:$0xf]
  %v75 = vld [vmem:[%s1 + $0x7c] sm:$0xf]
  %v84 = vunpack.c.l.b16 %v36
  %v85 = vunpack.c.h.b16 %v36
  %v86 = vunpack.c.l.b16 %v37
  %v87 = vunpack.c.h.b16 %v37
  %v88 = vunpack.c.l.b16 %v38
  %v89 = vunpack.c.h.b16 %v38
  %v90 = vunpack.c.l.b16 %v39
  %v91 = vunpack.c.h.b16 %v39
  %v92 = vunpack.c.l.b16 %v40
  %v93 = vunpack.c.h.b16 %v40
  %v94 = vunpack.c.l.b16 %v41
  %v95 = vunpack.c.h.b16 %v41
  %v96 = vunpack.c.l.b16 %v42
  %v97 = vunpack.c.h.b16 %v42
  %v98 = vunpack.c.l.b16 %v43
  %v99 = vunpack.c.h.b16 %v43
  %v100 = vpack.c.b16 %v86, %v84
  %v101 = vpack.c.b16 %v87, %v85
  %v102 = vpack.c.b16 %v90, %v88
  %v103 = vpack.c.b16 %v91, %v89
  %v104 = vpack.c.b16 %v94, %v92
  %v105 = vpack.c.b16 %v95, %v93
  %v106 = vpack.c.b16 %v98, %v96
  %v107 = vpack.c.b16 %v99, %v97
  %v148 = vunpack.c.l.b16 %v44
  %v149 = vunpack.c.l.b16 %v45
  %v150 = vunpack.c.l.b16 %v46
  %v151 = vunpack.c.l.b16 %v47
  %v152 = vunpack.c.l.b16 %v48
  %v153 = vunpack.c.l.b16 %v49
  %v154 = vunpack.c.l.b16 %v50
  %v155 = vunpack.c.l.b16 %v51
  %v156 = vunpack.c.l.b16 %v52
  %v157 = vunpack.c.l.b16 %v53
  %v158 = vunpack.c.l.b16 %v54
  %v159 = vunpack.c.l.b16 %v55
  %v160 = vunpack.c.l.b16 %v56
  %v161 = vunpack.c.l.b16 %v57
  %v162 = vunpack.c.l.b16 %v58
  %v163 = vunpack.c.l.b16 %v59
  %v164 = vunpack.c.l.b16 %v60
  %v165 = vunpack.c.l.b16 %v61
  %v166 = vunpack.c.l.b16 %v62
  %v167 = vunpack.c.l.b16 %v63
  %v168 = vunpack.c.l.b16 %v64
  %v169 = vunpack.c.l.b16 %v65
  %v170 = vunpack.c.l.b16 %v66
  %v171 = vunpack.c.l.b16 %v67
  %v172 = vunpack.c.l.b16 %v68
  %v173 = vunpack.c.l.b16 %v69
  %v174 = vunpack.c.l.b16 %v70
  %v175 = vunpack.c.l.b16 %v71
  %v176 = vunpack.c.l.b16 %v72
  %v177 = vunpack.c.l.b16 %v73
  %v178 = vunpack.c.l.b16 %v74
  %v179 = vunpack.c.l.b16 %v75
  %v180 = vpack.c.b16 %v149, %v148
  %v181 = vpack.c.b16 %v151, %v150
  %v182 = vpack.c.b16 %v153, %v152
  %v183 = vpack.c.b16 %v155, %v154
  %v184 = vpack.c.b16 %v157, %v156
  %v185 = vpack.c.b16 %v159, %v158
  %v186 = vpack.c.b16 %v161, %v160
  %v187 = vpack.c.b16 %v163, %v162
  %v188 = vpack.c.b16 %v165, %v164
  %v189 = vpack.c.b16 %v167, %v166
  %v190 = vpack.c.b16 %v169, %v168
  %v191 = vpack.c.b16 %v171, %v170
  %v192 = vpack.c.b16 %v173, %v172
  %v193 = vpack.c.b16 %v175, %v174
  %v194 = vpack.c.b16 %v177, %v176
  %v195 = vpack.c.b16 %v179, %v178
  %212 = vmatprep.subr.bf16.mxu0 0
  %213 = vmatpush1.bf16.msra.mxu0 %v180
  %214 = vmatprep.subr.bf16.mxu0 0
  %215 = vmatpush1.bf16.msra.mxu0 %v181
  %216 = vmatprep.subr.bf16.mxu0 0
  %217 = vmatpush1.bf16.msra.mxu0 %v182
  %218 = vmatprep.subr.bf16.mxu0 0
  %219 = vmatpush1.bf16.msra.mxu0 %v183
  %220 = vmatprep.subr.bf16.mxu0 0
  %221 = vmatpush1.bf16.msra.mxu0 %v184
  %222 = vmatprep.subr.bf16.mxu0 0
  %223 = vmatpush1.bf16.msra.mxu0 %v185
  %224 = vmatprep.subr.bf16.mxu0 0
  %225 = vmatpush1.bf16.msra.mxu0 %v186
  %226 = vmatprep.subr.bf16.mxu0 0
  %227 = vmatpush1.bf16.msra.mxu0 %v187
  %228 = vmatprep.subr.bf16.mxu0 0
  %229 = vmatpush1.bf16.msra.mxu0 %v188
  %230 = vmatprep.subr.bf16.mxu0 0
  %231 = vmatpush1.bf16.msra.mxu0 %v189
  %232 = vmatprep.subr.bf16.mxu0 0
  %233 = vmatpush1.bf16.msra.mxu0 %v190
  %234 = vmatprep.subr.bf16.mxu0 0
  %235 = vmatpush1.bf16.msra.mxu0 %v191
  %236 = vmatprep.subr.bf16.mxu0 0
  %237 = vmatpush1.bf16.msra.mxu0 %v192
  %238 = vmatprep.subr.bf16.mxu0 0
  %239 = vmatpush1.bf16.msra.mxu0 %v193
  %240 = vmatprep.subr.bf16.mxu0 0
  %241 = vmatpush1.bf16.msra.mxu0 %v194
  %242 = vmatprep.subr.bf16.mxu0 0
  %243 = vmatpush1.bf16.msra.mxu0 %v195
  %244 = vmatprep.mubr.bf16.mxu0 %v101
  %245 = vmatmul.mubr.bf16.gmra.mrb[0].mxu0 %v100
  %v246 = vpop.f32.mrb[0].mxu0
  %v247 = vadd.f32 0.0, %v246
  %v248 = vpop.f32.mrb[0].mxu0
  %v249 = vpop.f32.mrb[0].mxu0
  %v250 = vadd.f32 0.0, %v249
  %v251 = vpop.f32.mrb[0].mxu0
  %252 = vmatprep.mubr.bf16.mxu0 %v103
  %253 = vmatmul.mubr.bf16.gmra.mrb[0].mxu0 %v102
  %v254 = vpop.f32.mrb[0].mxu0
  %v255 = vadd.f32 0.0, %v254
  %v256 = vpop.f32.mrb[0].mxu0
  %v257 = vpop.f32.mrb[0].mxu0
  %v258 = vadd.f32 0.0, %v257
  %v259 = vpop.f32.mrb[0].mxu0
  %260 = vmatprep.mubr.bf16.mxu0 %v105
  %261 = vmatmul.mubr.bf16.gmra.mrb[0].mxu0 %v104
  %v262 = vpop.f32.mrb[0].mxu0
  %v263 = vadd.f32 0.0, %v262
  %v264 = vpop.f32.mrb[0].mxu0
  %v265 = vpop.f32.mrb[0].mxu0
  %v266 = vadd.f32 0.0, %v265
  %v267 = vpop.f32.mrb[0].mxu0
  %268 = vmatprep.mubr.bf16.mxu0 %v107
  %269 = vmatmul.mubr.bf16.gmra.mrb[0].mxu0 %v106
  %v270 = vpop.f32.mrb[0].mxu0
  %v271 = vadd.f32 0.0, %v270
  %v272 = vpop.f32.mrb[0].mxu0
  %v273 = vpop.f32.mrb[0].mxu0
  %v274 = vadd.f32 0.0, %v273
  %v275 = vpop.f32.mrb[0].mxu0
  %276 = vdwg.mxu0
  %v277 = vpack.c.bf16 %v250, %v247
  %v278 = vpack.c.bf16 %v258, %v255
  %v279 = vpack.c.bf16 %v266, %v263
  %v280 = vpack.c.bf16 %v274, %v271
  %v285 = vunpack.c.l.b16 %v277
  %v286 = vunpack.c.h.b16 %v277
  %v287 = vunpack.c.l.b16 %v278
  %v288 = vunpack.c.h.b16 %v278
  %v289 = vunpack.c.l.b16 %v279
  %v290 = vunpack.c.h.b16 %v279
  %v291 = vunpack.c.l.b16 %v280
  %v292 = vunpack.c.h.b16 %v280
  %v293 = vpack.c.b16 %v285, %v285
  %v294 = vpack.c.b16 %v286, %v286
  %v295 = vpack.c.b16 %v287, %v287
  %v296 = vpack.c.b16 %v288, %v288
  %v297 = vpack.c.b16 %v289, %v289
  %v298 = vpack.c.b16 %v290, %v290
  %v299 = vpack.c.b16 %v291, %v291
  %v300 = vpack.c.b16 %v292, %v292
  %vm309 = vcmask 257024
  %310 = vst.msk [vmem:[%s2] sm:$0xf] %vm309, %v293
  %311 = vst.msk [vmem:[%s2 + $0x4] sm:$0xf] %vm309, %v294
  %312 = vst.msk [vmem:[%s2 + $0x8] sm:$0xf] %vm309, %v295
  %313 = vst.msk [vmem:[%s2 + $0xc] sm:$0xf] %vm309, %v296
  %314 = vst.msk [vmem:[%s2 + $0x10] sm:$0xf] %vm309, %v297
  %315 = vst.msk [vmem:[%s2 + $0x14] sm:$0xf] %vm309, %v298
  %316 = vst.msk [vmem:[%s2 + $0x18] sm:$0xf] %vm309, %v299
  %317 = vst.msk [vmem:[%s2 + $0x1c] sm:$0xf] %vm309, %v300
  %v318 = vld [vmem:[%s3] sm:$0xff]
  %v319 = vld [vmem:[%s3 + $0x8] sm:$0xff]
  %v320 = vld [vmem:[%s3 + $0x10] sm:$0xff]
  %v321 = vld [vmem:[%s3 + $0x18] sm:$0xff]
  %v322 = vld [vmem:[%s3 + $0x20] sm:$0xff]
  %v323 = vld [vmem:[%s3 + $0x28] sm:$0xff]
  %v324 = vld [vmem:[%s3 + $0x30] sm:$0xff]
  %v325 = vld [vmem:[%s3 + $0x38] sm:$0xff]
  %vm326 = vcmask 261120
  %v327 = vsel %vm326, %v247, 0.0
  %328 = vadd.xlane.f32.xlu0 %v327
  %v329 = vpop.xlane.xlu0 %328
  %v330 = vsel %vm326, %v250, 0.0
  %331 = vadd.xlane.f32.xlu0 %v330
  %v332 = vpop.xlane.xlu0 %331
  %v333 = vsel %vm326, %v255, 0.0
  %334 = vadd.xlane.f32.xlu0 %v333
  %v335 = vpop.xlane.xlu0 %334
  %v336 = vsel %vm326, %v258, 0.0
  %337 = vadd.xlane.f32.xlu0 %v336
  %v338 = vpop.xlane.xlu0 %337
  %v339 = vsel %vm326, %v263, 0.0
  %340 = vadd.xlane.f32.xlu0 %v339
  %v341 = vpop.xlane.xlu0 %340
  %v342 = vsel %vm326, %v266, 0.0
  %343 = vadd.xlane.f32.xlu0 %v342
  %v344 = vpop.xlane.xlu0 %343
  %v345 = vsel %vm326, %v271, 0.0
  %346 = vadd.xlane.f32.xlu0 %v345
  %v347 = vpop.xlane.xlu0 %346
  %v348 = vsel %vm326, %v274, 0.0
  %349 = vadd.xlane.f32.xlu0 %v348
  %v350 = vpop.xlane.xlu0 %349
  %v351 = vadd.f32 %v318, %v329
  %v352 = vadd.f32 %v319, %v332
  %v353 = vadd.f32 %v320, %v335
  %v354 = vadd.f32 %v321, %v338
  %v355 = vadd.f32 %v322, %v341
  %v356 = vadd.f32 %v323, %v344
  %v357 = vadd.f32 %v324, %v347
  %v358 = vadd.f32 %v325, %v350
  %vm359 = vcmask 7168
  %360 = vst.msk [vmem:[%s3] sm:$0xff] %vm359, %v351
  %361 = vst.msk [vmem:[%s3 + $0x8] sm:$0xff] %vm359, %v352
  %362 = vst.msk [vmem:[%s3 + $0x10] sm:$0xff] %vm359, %v353
  %363 = vst.msk [vmem:[%s3 + $0x18] sm:$0xff] %vm359, %v354
  %364 = vst.msk [vmem:[%s3 + $0x20] sm:$0xff] %vm359, %v355
  %365 = vst.msk [vmem:[%s3 + $0x28] sm:$0xff] %vm359, %v356
  %366 = vst.msk [vmem:[%s3 + $0x30] sm:$0xff] %vm359, %v357
  %367 = vst.msk [vmem:[%s3 + $0x38] sm:$0xff] %vm359, %v358
  %v368 = vld [vmem:[%s4] sm:$0xff]
  %v369 = vld [vmem:[%s4 + $0x8] sm:$0xff]
  %v370 = vld [vmem:[%s4 + $0x10] sm:$0xff]
  %v371 = vld [vmem:[%s4 + $0x18] sm:$0xff]
  %v372 = vld [vmem:[%s4 + $0x20] sm:$0xff]
  %v373 = vld [vmem:[%s4 + $0x28] sm:$0xff]
  %v374 = vld [vmem:[%s4 + $0x30] sm:$0xff]
  %v375 = vld [vmem:[%s4 + $0x38] sm:$0xff]
  %v376 = vmul.f32 %v247, %v247
  %v377 = vmul.f32 %v250, %v250
  %v378 = vmul.f32 %v255, %v255
  %v379 = vmul.f32 %v258, %v258
  %v380 = vmul.f32 %v263, %v263
  %v381 = vmul.f32 %v266, %v266
  %v382 = vmul.f32 %v271, %v271
  %v383 = vmul.f32 %v274, %v274
  %v384 = vsel %vm326, %v376, 0.0
  %385 = vadd.xlane.f32.xlu0 %v384
  %v386 = vpop.xlane.xlu0 %385
  %v387 = vsel %vm326, %v377, 0.0
  %388 = vadd.xlane.f32.xlu0 %v387
  %v389 = vpop.xlane.xlu0 %388
  %v390 = vsel %vm326, %v378, 0.0
  %391 = vadd.xlane.f32.xlu0 %v390
  %v392 = vpop.xlane.xlu0 %391
  %v393 = vsel %vm326, %v379, 0.0
  %394 = vadd.xlane.f32.xlu0 %v393
  %v395 = vpop.xlane.xlu0 %394
  %v396 = vsel %vm326, %v380, 0.0
  %397 = vadd.xlane.f32.xlu0 %v396
  %v398 = vpop.xlane.xlu0 %397
  %v399 = vsel %vm326, %v381, 0.0
  %400 = vadd.xlane.f32.xlu0 %v399
  %v401 = vpop.xlane.xlu0 %400
  %v402 = vsel %vm326, %v382, 0.0
  %403 = vadd.xlane.f32.xlu0 %v402
  %v404 = vpop.xlane.xlu0 %403
  %v405 = vsel %vm326, %v383, 0.0
  %406 = vadd.xlane.f32.xlu0 %v405
  %v407 = vpop.xlane.xlu0 %406
  %v408 = vadd.f32 %v368, %v386
  %v409 = vadd.f32 %v369, %v389
  %v410 = vadd.f32 %v370, %v392
  %v411 = vadd.f32 %v371, %v395
  %v412 = vadd.f32 %v372, %v398
  %v413 = vadd.f32 %v373, %v401
  %v414 = vadd.f32 %v374, %v404
  %v415 = vadd.f32 %v375, %v407
  %416 = vst.msk [vmem:[%s4] sm:$0xff] %vm359, %v408
  %417 = vst.msk [vmem:[%s4 + $0x8] sm:$0xff] %vm359, %v409
  %418 = vst.msk [vmem:[%s4 + $0x10] sm:$0xff] %vm359, %v410
  %419 = vst.msk [vmem:[%s4 + $0x18] sm:$0xff] %vm359, %v411
  %420 = vst.msk [vmem:[%s4 + $0x20] sm:$0xff] %vm359, %v412
  %421 = vst.msk [vmem:[%s4 + $0x28] sm:$0xff] %vm359, %v413
  %422 = vst.msk [vmem:[%s4 + $0x30] sm:$0xff] %vm359, %v414
  %423 = vst.msk [vmem:[%s4 + $0x38] sm:$0xff] %vm359, %v415
  // Predicated region
  $region14: #{generator_forward.21} parent=0 // pred_check
    _
  $region15: #{generator_forward.21} parent=0 // pred_check_branch
    %425 = sbr.rel (0) target = $region17
  $region16: #{generator_forward.21} parent=0 // pred_region
    _
  $region17: #{generator_forward.21} parent=0 // pred_fallthru
    _
  // Predicated region
  $region18: #{generator_forward.21} parent=0 // pred_check
    _
  $region19: #{generator_forward.21} parent=0 // pred_check_branch
    %427 = sbr.rel (0) target = $region21
  $region20: #{generator_forward.21} parent=0 // pred_region
    _
  $region21: #{generator_forward.21} parent=0 // pred_fallthru
    _
  // Predicated region
  $region22: #{generator_forward.21} parent=0 // pred_check
    _
  $region23: #{generator_forward.21} parent=0 // pred_check_branch
    %429 = sbr.rel (0) target = $region25
  $region24: #{generator_forward.21} parent=0 // pred_region
    _
  $region25: #{generator_forward.21} parent=0 // pred_fallthru
    _
  // Predicated region
  $region26: #{generator_forward.21} parent=0 // pred_check
    _
  $region27: #{generator_forward.21} parent=0 // pred_check_branch
    %431 = sbr.rel (0) target = $region29
  $region28: #{generator_forward.21} parent=0 // pred_region
    _
  $region29: #{generator_forward.21} parent=0 // pred_fallthru
    _
  // Predicated region
  $region30: #{generator_forward.21} parent=0 // pred_check
    _
  $region31: #{generator_forward.21} parent=0 // pred_check_branch
    %433 = sbr.rel (0) target = $region33
  $region32: #{generator_forward.21} parent=0 // pred_region
    _
  $region33: #{generator_forward.21} parent=0 // pred_fallthru
    _
  // Predicated region
  $region34: #{generator_forward.21} parent=0 // pred_check
    _
  $region35: #{generator_forward.21} parent=0 // pred_check_branch
    %435 = sbr.rel (0) target = $region37
  $region36: #{generator_forward.21} parent=0 // pred_region
    _
  $region37: #{generator_forward.21} parent=0 // pred_fallthru
    _

// kernel: generator_forward.26
$region0: #{generator_forward.26}
  #allocation0 [shape = 'u32[]', space=smem, size = 0x4, offset = 0x4, fixed_abs, tag = 'smem constant byte address 0x4 - core index']
  #allocation1 [shape = 'u32[144,128]{1,0:T(1,128)}', space=vmem, size = 0x12000, scoped, tag = 'internal scratch']
  %s0 = inlined_call_operand.vmem [shape: bf16[32,256], index: 0, kind: input, shape index: {}]
  %s1 = inlined_call_operand.vmem [shape: bf16[256,32], index: 1, kind: input, shape index: {}]
  %s2 = inlined_call_operand.vmem [shape: bf16[32,32], index: 2, kind: output, shape index: {0}]
  %s3 = inlined_call_operand.vmem [shape: f32[32,1], index: 3, kind: output, shape index: {1}]
  %s4 = inlined_call_operand.vmem [shape: f32[32,1], index: 4, kind: output, shape index: {2}]
  %5 = xla_tuple %s2, %s3, %s4
  %s6 = sld [smem:[#allocation0]]
  $region38: #{generator_forward.26} parent=0
    _
  %s8 = ssub.s32 1, %s6
  %s9 = scalar_select 0, %s8, %s6
  // Predicated region
  $region2: #{generator_forward.26} parent=0 // pred_check
    _
  $region3: #{generator_forward.26} parent=0 // pred_check_branch
    %11 = sbr.rel (0) target = $region5
  $region4: #{generator_forward.26} parent=0 // pred_region
    _
  $region5: #{generator_forward.26} parent=0 // pred_fallthru
    _
  // Predicated region
  $region6: #{generator_forward.26} parent=0 // pred_check
    _
  $region7: #{generator_forward.26} parent=0 // pred_check_branch
    %13 = sbr.rel (0) target = $region9
  $region8: #{generator_forward.26} parent=0 // pred_region
    _
  $region9: #{generator_forward.26} parent=0 // pred_fallthru
    _
  %p15 = scmp.eq.s32.totalorder 0, 0
  // Predicated region
  $region10: #{generator_forward.26} parent=0 // pred_check
    %p16 = pneg %p15
  $region11: #{generator_forward.26} parent=0 // pred_check_branch
    %18 = sbr.rel (%p16) target = $region13
  $region12: #{generator_forward.26} parent=0 // pred_region
    %vm19 = vcmask 7168
    %20 = vst.msk [vmem:[%s3] sm:$0xff] %vm19, 0.0
    %21 = vst.msk [vmem:[%s3 + $0x8] sm:$0xff] %vm19, 0.0
    %22 = vst.msk [vmem:[%s3 + $0x10] sm:$0xff] %vm19, 0.0
    %23 = vst.msk [vmem:[%s3 + $0x18] sm:$0xff] %vm19, 0.0
    %24 = vst.msk [vmem:[%s4] sm:$0xff] %vm19, 0.0
    %25 = vst.msk [vmem:[%s4 + $0x8] sm:$0xff] %vm19, 0.0
    %26 = vst.msk [vmem:[%s4 + $0x10] sm:$0xff] %vm19, 0.0
    %27 = vst.msk [vmem:[%s4 + $0x18] sm:$0xff] %vm19, 0.0
  $region13: #{generator_forward.26} parent=0 // pred_fallthru
    _
  %v28 = vld [vmem:[%s0] sm:$0xff]
  %v29 = vld [vmem:[%s0 + $0x8] sm:$0xff]
  %v30 = vld [vmem:[%s0 + $0x10] sm:$0xff]
  %v31 = vld [vmem:[%s0 + $0x18] sm:$0xff]
  %v32 = vld [vmem:[%s1] sm:$0xf]
  %v33 = vld [vmem:[%s1 + $0x4] sm:$0xf]
  %v34 = vld [vmem:[%s1 + $0x8] sm:$0xf]
  %v35 = vld [vmem:[%s1 + $0xc] sm:$0xf]
  %v36 = vld [vmem:[%s1 + $0x10] sm:$0xf]
  %v37 = vld [vmem:[%s1 + $0x14] sm:$0xf]
  %v38 = vld [vmem:[%s1 + $0x18] sm:$0xf]
  %v39 = vld [vmem:[%s1 + $0x1c] sm:$0xf]
  %v40 = vld [vmem:[%s1 + $0x20] sm:$0xf]
  %v41 = vld [vmem:[%s1 + $0x24] sm:$0xf]
  %v42 = vld [vmem:[%s1 + $0x28] sm:$0xf]
  %v43 = vld [vmem:[%s1 + $0x2c] sm:$0xf]
  %v44 = vld [vmem:[%s1 + $0x30] sm:$0xf]
  %v45 = vld [vmem:[%s1 + $0x34] sm:$0xf]
  %v46 = vld [vmem:[%s1 + $0x38] sm:$0xf]
  %v47 = vld [vmem:[%s1 + $0x3c] sm:$0xf]
  %v48 = vld [vmem:[%s1 + $0x40] sm:$0xf]
  %v49 = vld [vmem:[%s1 + $0x44] sm:$0xf]
  %v50 = vld [vmem:[%s1 + $0x48] sm:$0xf]
  %v51 = vld [vmem:[%s1 + $0x4c] sm:$0xf]
  %v52 = vld [vmem:[%s1 + $0x50] sm:$0xf]
  %v53 = vld [vmem:[%s1 + $0x54] sm:$0xf]
  %v54 = vld [vmem:[%s1 + $0x58] sm:$0xf]
  %v55 = vld [vmem:[%s1 + $0x5c] sm:$0xf]
  %v56 = vld [vmem:[%s1 + $0x60] sm:$0xf]
  %v57 = vld [vmem:[%s1 + $0x64] sm:$0xf]
  %v58 = vld [vmem:[%s1 + $0x68] sm:$0xf]
  %v59 = vld [vmem:[%s1 + $0x6c] sm:$0xf]
  %v60 = vld [vmem:[%s1 + $0x70] sm:$0xf]
  %v61 = vld [vmem:[%s1 + $0x74] sm:$0xf]
  %v62 = vld [vmem:[%s1 + $0x78] sm:$0xf]
  %v63 = vld [vmem:[%s1 + $0x7c] sm:$0xf]
  %v68 = vunpack.c.l.b16 %v28
  %v69 = vunpack.c.h.b16 %v28
  %v70 = vunpack.c.l.b16 %v29
  %v71 = vunpack.c.h.b16 %v29
  %v72 = vunpack.c.l.b16 %v30
  %v73 = vunpack.c.h.b16 %v30
  %v74 = vunpack.c.l.b16 %v31
  %v75 = vunpack.c.h.b16 %v31
  %v76 = vpack.c.b16 %v70, %v68
  %v77 = vpack.c.b16 %v71, %v69
  %v78 = vpack.c.b16 %v74, %v72
  %v79 = vpack.c.b16 %v75, %v73
  %v116 = vunpack.c.l.b16 %v32
  %v117 = vunpack.c.l.b16 %v33
  %v118 = vunpack.c.l.b16 %v34
  %v119 = vunpack.c.l.b16 %v35
  %v120 = vunpack.c.l.b16 %v36
  %v121 = vunpack.c.l.b16 %v37
  %v122 = vunpack.c.l.b16 %v38
  %v123 = vunpack.c.l.b16 %v39
  %v124 = vunpack.c.l.b16 %v40
  %v125 = vunpack.c.l.b16 %v41
  %v126 = vunpack.c.l.b16 %v42
  %v127 = vunpack.c.l.b16 %v43
  %v128 = vunpack.c.l.b16 %v44
  %v129 = vunpack.c.l.b16 %v45
  %v130 = vunpack.c.l.b16 %v46
  %v131 = vunpack.c.l.b16 %v47
  %v132 = vunpack.c.l.b16 %v48
  %v133 = vunpack.c.l.b16 %v49
  %v134 = vunpack.c.l.b16 %v50
  %v135 = vunpack.c.l.b16 %v51
  %v136 = vunpack.c.l.b16 %v52
  %v137 = vunpack.c.l.b16 %v53
  %v138 = vunpack.c.l.b16 %v54
  %v139 = vunpack.c.l.b16 %v55
  %v140 = vunpack.c.l.b16 %v56
  %v141 = vunpack.c.l.b16 %v57
  %v142 = vunpack.c.l.b16 %v58
  %v143 = vunpack.c.l.b16 %v59
  %v144 = vunpack.c.l.b16 %v60
  %v145 = vunpack.c.l.b16 %v61
  %v146 = vunpack.c.l.b16 %v62
  %v147 = vunpack.c.l.b16 %v63
  %v148 = vpack.c.b16 %v117, %v116
  %v149 = vpack.c.b16 %v119, %v118
  %v150 = vpack.c.b16 %v121, %v120
  %v151 = vpack.c.b16 %v123, %v122
  %v152 = vpack.c.b16 %v125, %v124
  %v153 = vpack.c.b16 %v127, %v126
  %v154 = vpack.c.b16 %v129, %v128
  %v155 = vpack.c.b16 %v131, %v130
  %v156 = vpack.c.b16 %v133, %v132
  %v157 = vpack.c.b16 %v135, %v134
  %v158 = vpack.c.b16 %v137, %v136
  %v159 = vpack.c.b16 %v139, %v138
  %v160 = vpack.c.b16 %v141, %v140
  %v161 = vpack.c.b16 %v143, %v142
  %v162 = vpack.c.b16 %v145, %v144
  %v163 = vpack.c.b16 %v147, %v146
  %180 = vmatprep.subr.bf16.mxu0 0
  %181 = vmatpush1.bf16.msra.mxu0 %v148
  %182 = vmatprep.subr.bf16.mxu0 0
  %183 = vmatpush1.bf16.msra.mxu0 %v149
  %184 = vmatprep.subr.bf16.mxu0 0
  %185 = vmatpush1.bf16.msra.mxu0 %v150
  %186 = vmatprep.subr.bf16.mxu0 0
  %187 = vmatpush1.bf16.msra.mxu0 %v151
  %188 = vmatprep.subr.bf16.mxu0 0
  %189 = vmatpush1.bf16.msra.mxu0 %v152
  %190 = vmatprep.subr.bf16.mxu0 0
  %191 = vmatpush1.bf16.msra.mxu0 %v153
  %192 = vmatprep.subr.bf16.mxu0 0
  %193 = vmatpush1.bf16.msra.mxu0 %v154
  %194 = vmatprep.subr.bf16.mxu0 0
  %195 = vmatpush1.bf16.msra.mxu0 %v155
  %196 = vmatprep.subr.bf16.mxu0 0
  %197 = vmatpush1.bf16.msra.mxu0 %v156
  %198 = vmatprep.subr.bf16.mxu0 0
  %199 = vmatpush1.bf16.msra.mxu0 %v157
  %200 = vmatprep.subr.bf16.mxu0 0
  %201 = vmatpush1.bf16.msra.mxu0 %v158
  %202 = vmatprep.subr.bf16.mxu0 0
  %203 = vmatpush1.bf16.msra.mxu0 %v159
  %204 = vmatprep.subr.bf16.mxu0 0
  %205 = vmatpush1.bf16.msra.mxu0 %v160
  %206 = vmatprep.subr.bf16.mxu0 0
  %207 = vmatpush1.bf16.msra.mxu0 %v161
  %208 = vmatprep.subr.bf16.mxu0 0
  %209 = vmatpush1.bf16.msra.mxu0 %v162
  %210 = vmatprep.subr.bf16.mxu0 0
  %211 = vmatpush1.bf16.msra.mxu0 %v163
  %212 = vmatprep.mubr.bf16.mxu0 %v77
  %213 = vmatmul.mubr.bf16.gmra.mrb[0].mxu0 %v76
  %v214 = vpop.f32.mrb[0].mxu0
  %v215 = vadd.f32 0.0, %v214
  %v216 = vpop.f32.mrb[0].mxu0
  %v217 = vpop.f32.mrb[0].mxu0
  %v218 = vadd.f32 0.0, %v217
  %v219 = vpop.f32.mrb[0].mxu0
  %220 = vmatprep.mubr.bf16.mxu0 %v79
  %221 = vmatmul.mubr.bf16.gmra.mrb[0].mxu0 %v78
  %v222 = vpop.f32.mrb[0].mxu0
  %v223 = vadd.f32 0.0, %v222
  %v224 = vpop.f32.mrb[0].mxu0
  %v225 = vpop.f32.mrb[0].mxu0
  %v226 = vadd.f32 0.0, %v225
  %v227 = vpop.f32.mrb[0].mxu0
  %228 = vdwg.mxu0
  %v229 = vpack.c.bf16 %v218, %v215
  %v230 = vpack.c.bf16 %v226, %v223
  %v233 = vunpack.c.l.b16 %v229
  %v234 = vunpack.c.h.b16 %v229
  %v235 = vunpack.c.l.b16 %v230
  %v236 = vunpack.c.h.b16 %v230
  %v237 = vpack.c.b16 %v233, %v233
  %v238 = vpack.c.b16 %v234, %v234
  %v239 = vpack.c.b16 %v235, %v235
  %v240 = vpack.c.b16 %v236, %v236
  %vm245 = vcmask 257024
  %246 = vst.msk [vmem:[%s2] sm:$0xf] %vm245, %v237
  %247 = vst.msk [vmem:[%s2 + $0x4] sm:$0xf] %vm245, %v238
  %248 = vst.msk [vmem:[%s2 + $0x8] sm:$0xf] %vm245, %v239
  %249 = vst.msk [vmem:[%s2 + $0xc] sm:$0xf] %vm245, %v240
  %v250 = vld [vmem:[%s3] sm:$0xff]
  %v251 = vld [vmem:[%s3 + $0x8] sm:$0xff]
  %v252 = vld [vmem:[%s3 + $0x10] sm:$0xff]
  %v253 = vld [vmem:[%s3 + $0x18] sm:$0xff]
  %vm254 = vcmask 261120
  %v255 = vsel %vm254, %v215, 0.0
  %256 = vadd.xlane.f32.xlu0 %v255
  %v257 = vpop.xlane.xlu0 %256
  %v258 = vsel %vm254, %v218, 0.0
  %259 = vadd.xlane.f32.xlu0 %v258
  %v260 = vpop.xlane.xlu0 %259
  %v261 = vsel %vm254, %v223, 0.0
  %262 = vadd.xlane.f32.xlu0 %v261
  %v263 = vpop.xlane.xlu0 %262
  %v264 = vsel %vm254, %v226, 0.0
  %265 = vadd.xlane.f32.xlu0 %v264
  %v266 = vpop.xlane.xlu0 %265
  %v267 = vadd.f32 %v250, %v257
  %v268 = vadd.f32 %v251, %v260
  %v269 = vadd.f32 %v252, %v263
  %v270 = vadd.f32 %v253, %v266
  %vm271 = vcmask 7168
  %272 = vst.msk [vmem:[%s3] sm:$0xff] %vm271, %v267
  %273 = vst.msk [vmem:[%s3 + $0x8] sm:$0xff] %vm271, %v268
  %274 = vst.msk [vmem:[%s3 + $0x10] sm:$0xff] %vm271, %v269
  %275 = vst.msk [vmem:[%s3 + $0x18] sm:$0xff] %vm271, %v270
  %v276 = vld [vmem:[%s4] sm:$0xff]
  %v277 = vld [vmem:[%s4 + $0x8] sm:$0xff]
  %v278 = vld [vmem:[%s4 + $0x10] sm:$0xff]
  %v279 = vld [vmem:[%s4 + $0x18] sm:$0xff]
  %v280 = vmul.f32 %v215, %v215
  %v281 = vmul.f32 %v218, %v218
  %v282 = vmul.f32 %v223, %v223
  %v283 = vmul.f32 %v226, %v226
  %v284 = vsel %vm254, %v280, 0.0
  %285 = vadd.xlane.f32.xlu0 %v284
  %v286 = vpop.xlane.xlu0 %285
  %v287 = vsel %vm254, %v281, 0.0
  %288 = vadd.xlane.f32.xlu0 %v287
  %v289 = vpop.xlane.xlu0 %288
  %v290 = vsel %vm254, %v282, 0.0
  %291 = vadd.xlane.f32.xlu0 %v290
  %v292 = vpop.xlane.xlu0 %291
  %v293 = vsel %vm254, %v283, 0.0
  %294 = vadd.xlane.f32.xlu0 %v293
  %v295 = vpop.xlane.xlu0 %294
  %v296 = vadd.f32 %v276, %v286
  %v297 = vadd.f32 %v277, %v289
  %v298 = vadd.f32 %v278, %v292
  %v299 = vadd.f32 %v279, %v295
  %300 = vst.msk [vmem:[%s4] sm:$0xff] %vm271, %v296
  %301 = vst.msk [vmem:[%s4 + $0x8] sm:$0xff] %vm271, %v297
  %302 = vst.msk [vmem:[%s4 + $0x10] sm:$0xff] %vm271, %v298
  %303 = vst.msk [vmem:[%s4 + $0x18] sm:$0xff] %vm271, %v299
  // Predicated region
  $region14: #{generator_forward.26} parent=0 // pred_check
    _
  $region15: #{generator_forward.26} parent=0 // pred_check_branch
    %305 = sbr.rel (0) target = $region17
  $region16: #{generator_forward.26} parent=0 // pred_region
    _
  $region17: #{generator_forward.26} parent=0 // pred_fallthru
    _
  // Predicated region
  $region18: #{generator_forward.26} parent=0 // pred_check
    _
  $region19: #{generator_forward.26} parent=0 // pred_check_branch
    %307 = sbr.rel (0) target = $region21
  $region20: #{generator_forward.26} parent=0 // pred_region
    _
  $region21: #{generator_forward.26} parent=0 // pred_fallthru
    _
  // Predicated region
  $region22: #{generator_forward.26} parent=0 // pred_check
    _
  $region23: #{generator_forward.26} parent=0 // pred_check_branch
    %309 = sbr.rel (0) target = $region25
  $region24: #{generator_forward.26} parent=0 // pred_region
    _
  $region25: #{generator_forward.26} parent=0 // pred_fallthru
    _
  // Predicated region
  $region26: #{generator_forward.26} parent=0 // pred_check
    _
  $region27: #{generator_forward.26} parent=0 // pred_check_branch
    %311 = sbr.rel (0) target = $region29
  $region28: #{generator_forward.26} parent=0 // pred_region
    _
  $region29: #{generator_forward.26} parent=0 // pred_fallthru
    _
  // Predicated region
  $region30: #{generator_forward.26} parent=0 // pred_check
    _
  $region31: #{generator_forward.26} parent=0 // pred_check_branch
    %313 = sbr.rel (0) target = $region33
  $region32: #{generator_forward.26} parent=0 // pred_region
    _
  $region33: #{generator_forward.26} parent=0 // pred_fallthru
    _
  // Predicated region
  $region34: #{generator_forward.26} parent=0 // pred_check
    _
  $region35: #{generator_forward.26} parent=0 // pred_check_branch
    %315 = sbr.rel (0) target = $region37
  $region36: #{generator_forward.26} parent=0 // pred_region
    _
  $region37: #{generator_forward.26} parent=0 // pred_fallthru
    _

// kernel: generator_forward.27
$region0: #{generator_forward.27}
  #allocation0 [shape = 'u32[]', space=smem, size = 0x4, offset = 0x4, fixed_abs, tag = 'smem constant byte address 0x4 - core index']
  #allocation1 [shape = 'u32[144,128]{1,0:T(1,128)}', space=vmem, size = 0x12000, scoped, tag = 'internal scratch']
  %s0 = inlined_call_operand.vmem [shape: bf16[32,128], index: 0, kind: input, shape index: {}]
  %s1 = inlined_call_operand.vmem [shape: f32[32,1], index: 1, kind: input, shape index: {}]
  %s2 = inlined_call_operand.vmem [shape: f32[32,1], index: 2, kind: input, shape index: {}]
  %s3 = inlined_call_operand.vmem [shape: bf16[32,128], index: 3, kind: output, shape index: {}]
  %s4 = sld [smem:[#allocation0]]
  $region22: #{generator_forward.27} parent=0
    _
  %s6 = ssub.s32 1, %s4
  %s7 = scalar_select 0, %s6, %s4
  // Predicated region
  $region2: #{generator_forward.27} parent=0 // pred_check
    _
  $region3: #{generator_forward.27} parent=0 // pred_check_branch
    %9 = sbr.rel (0) target = $region5
  $region4: #{generator_forward.27} parent=0 // pred_region
    _
  $region5: #{generator_forward.27} parent=0 // pred_fallthru
    _
  // Predicated region
  $region6: #{generator_forward.27} parent=0 // pred_check
    _
  $region7: #{generator_forward.27} parent=0 // pred_check_branch
    %11 = sbr.rel (0) target = $region9
  $region8: #{generator_forward.27} parent=0 // pred_region
    _
  $region9: #{generator_forward.27} parent=0 // pred_fallthru
    _
  // Predicated region
  $region10: #{generator_forward.27} parent=0 // pred_check
    _
  $region11: #{generator_forward.27} parent=0 // pred_check_branch
    %13 = sbr.rel (0) target = $region13
  $region12: #{generator_forward.27} parent=0 // pred_region
    _
  $region13: #{generator_forward.27} parent=0 // pred_fallthru
    _
  %v14 = vld [vmem:[%s0] sm:$0xf]
  %v15 = vld [vmem:[%s0 + $0x4] sm:$0xf]
  %v16 = vld [vmem:[%s0 + $0x8] sm:$0xf]
  %v17 = vld [vmem:[%s0 + $0xc] sm:$0xf]
  %v18 = vunpack.c.l.bf16 %v14
  %v19 = vunpack.c.l.bf16 %v15
  %v20 = vunpack.c.l.bf16 %v16
  %v21 = vunpack.c.l.bf16 %v17
  %v22 = vld [vmem:[%s1] sm:$0xff]
  %v23 = vld [vmem:[%s1 + $0x8] sm:$0xff]
  %v24 = vld [vmem:[%s1 + $0x10] sm:$0xff]
  %v25 = vld [vmem:[%s1 + $0x18] sm:$0xff]
  %27 = vset.pattern.permute.xlu0 0
  %28 = vperm.xlu0 %27, %v22
  %v29 = vpop.permute.xlu0 %28
  %32 = vset.pattern.permute.xlu0 0
  %33 = vperm.xlu0 %32, %v23
  %v34 = vpop.permute.xlu0 %33
  %37 = vset.pattern.permute.xlu0 0
  %38 = vperm.xlu0 %37, %v24
  %v39 = vpop.permute.xlu0 %38
  %42 = vset.pattern.permute.xlu0 0
  %43 = vperm.xlu0 %42, %v25
  %v44 = vpop.permute.xlu0 %43
  %v46 = vmul.f32 %v18, %v29
  %v47 = vmul.f32 %v19, %v34
  %v48 = vmul.f32 %v20, %v39
  %v49 = vmul.f32 %v21, %v44
  %v50 = vld [vmem:[%s2] sm:$0xff]
  %v51 = vld [vmem:[%s2 + $0x8] sm:$0xff]
  %v52 = vld [vmem:[%s2 + $0x10] sm:$0xff]
  %v53 = vld [vmem:[%s2 + $0x18] sm:$0xff]
  %55 = vset.pattern.permute.xlu0 0
  %56 = vperm.xlu0 %55, %v50
  %v57 = vpop.permute.xlu0 %56
  %60 = vset.pattern.permute.xlu0 0
  %61 = vperm.xlu0 %60, %v51
  %v62 = vpop.permute.xlu0 %61
  %65 = vset.pattern.permute.xlu0 0
  %66 = vperm.xlu0 %65, %v52
  %v67 = vpop.permute.xlu0 %66
  %70 = vset.pattern.permute.xlu0 0
  %71 = vperm.xlu0 %70, %v53
  %v72 = vpop.permute.xlu0 %71
  %v74 = vadd.f32 %v46, %v57
  %v75 = vadd.f32 %v47, %v62
  %v76 = vadd.f32 %v48, %v67
  %v77 = vadd.f32 %v49, %v72
  %v78 = vmax.f32 %v74, 0.0
  %v79 = vmax.f32 %v75, 0.0
  %v80 = vmax.f32 %v76, 0.0
  %v81 = vmax.f32 %v77, 0.0
  %v82 = vpack.c.bf16 %v79, %v78
  %v83 = vpack.c.bf16 %v81, %v80
  %v86 = vunpack.c.l.b16 %v82
  %v87 = vunpack.c.h.b16 %v82
  %v88 = vunpack.c.l.b16 %v83
  %v89 = vunpack.c.h.b16 %v83
  %v90 = vpack.c.b16 %v86, %v86
  %v91 = vpack.c.b16 %v87, %v87
  %v92 = vpack.c.b16 %v88, %v88
  %v93 = vpack.c.b16 %v89, %v89
  %98 = vst [vmem:[%s3] sm:$0xf] %v90
  %99 = vst [vmem:[%s3 + $0x4] sm:$0xf] %v91
  %100 = vst [vmem:[%s3 + $0x8] sm:$0xf] %v92
  %101 = vst [vmem:[%s3 + $0xc] sm:$0xf] %v93
  // Predicated region
  $region14: #{generator_forward.27} parent=0 // pred_check
    _
  $region15: #{generator_forward.27} parent=0 // pred_check_branch
    %103 = sbr.rel (0) target = $region17
  $region16: #{generator_forward.27} parent=0 // pred_region
    _
  $region17: #{generator_forward.27} parent=0 // pred_fallthru
    _
  // Predicated region
  $region18: #{generator_forward.27} parent=0 // pred_check
    _
  $region19: #{generator_forward.27} parent=0 // pred_check_branch
    %105 = sbr.rel (0) target = $region21
  $region20: #{generator_forward.27} parent=0 // pred_region
    _
  $region21: #{generator_forward.27} parent=0 // pred_fallthru
    _

// kernel: generator_forward.28
$region0: #{generator_forward.28}
  #allocation0 [shape = 'u32[]', space=smem, size = 0x4, offset = 0x4, fixed_abs, tag = 'smem constant byte address 0x4 - core index']
  #allocation1 [shape = 'u32[144,128]{1,0:T(1,128)}', space=vmem, size = 0x12000, scoped, tag = 'internal scratch']
  %s0 = inlined_call_operand.vmem [shape: bf16[16,128], index: 0, kind: input, shape index: {}]
  %s1 = inlined_call_operand.vmem [shape: bf16[128,128], index: 1, kind: input, shape index: {}]
  %s2 = inlined_call_operand.vmem [shape: bf16[16,128], index: 2, kind: output, shape index: {0}]
  %s3 = inlined_call_operand.vmem [shape: f32[16,1], index: 3, kind: output, shape index: {1}]
  %s4 = inlined_call_operand.vmem [shape: f32[16,1], index: 4, kind: output, shape index: {2}]
  %5 = xla_tuple %s2, %s3, %s4
  %s6 = sld [smem:[#allocation0]]
  $region38: #{generator_forward.28} parent=0
    _
  %s8 = ssub.s32 1, %s6
  %s9 = scalar_select 0, %s8, %s6
  // Predicated region
  $region2: #{generator_forward.28} parent=0 // pred_check
    _
  $region3: #{generator_forward.28} parent=0 // pred_check_branch
    %11 = sbr.rel (0) target = $region5
  $region4: #{generator_forward.28} parent=0 // pred_region
    _
  $region5: #{generator_forward.28} parent=0 // pred_fallthru
    _
  // Predicated region
  $region6: #{generator_forward.28} parent=0 // pred_check
    _
  $region7: #{generator_forward.28} parent=0 // pred_check_branch
    %13 = sbr.rel (0) target = $region9
  $region8: #{generator_forward.28} parent=0 // pred_region
    _
  $region9: #{generator_forward.28} parent=0 // pred_fallthru
    _
  %p15 = scmp.eq.s32.totalorder 0, 0
  // Predicated region
  $region10: #{generator_forward.28} parent=0 // pred_check
    %p16 = pneg %p15
  $region11: #{generator_forward.28} parent=0 // pred_check_branch
    %18 = sbr.rel (%p16) target = $region13
  $region12: #{generator_forward.28} parent=0 // pred_region
    %vm19 = vcmask 7168
    %20 = vst.msk [vmem:[%s3] sm:$0xff] %vm19, 0.0
    %21 = vst.msk [vmem:[%s3 + $0x8] sm:$0xff] %vm19, 0.0
    %22 = vst.msk [vmem:[%s4] sm:$0xff] %vm19, 0.0
    %23 = vst.msk [vmem:[%s4 + $0x8] sm:$0xff] %vm19, 0.0
  $region13: #{generator_forward.28} parent=0 // pred_fallthru
    _
  %v24 = vld [vmem:[%s0] sm:$0xf]
  %v25 = vld [vmem:[%s0 + $0x4] sm:$0xf]
  %v26 = vld [vmem:[%s1] sm:$0xf]
  %v27 = vld [vmem:[%s1 + $0x4] sm:$0xf]
  %v28 = vld [vmem:[%s1 + $0x8] sm:$0xf]
  %v29 = vld [vmem:[%s1 + $0xc] sm:$0xf]
  %v30 = vld [vmem:[%s1 + $0x10] sm:$0xf]
  %v31 = vld [vmem:[%s1 + $0x14] sm:$0xf]
  %v32 = vld [vmem:[%s1 + $0x18] sm:$0xf]
  %v33 = vld [vmem:[%s1 + $0x1c] sm:$0xf]
  %v34 = vld [vmem:[%s1 + $0x20] sm:$0xf]
  %v35 = vld [vmem:[%s1 + $0x24] sm:$0xf]
  %v36 = vld [vmem:[%s1 + $0x28] sm:$0xf]
  %v37 = vld [vmem:[%s1 + $0x2c] sm:$0xf]
  %v38 = vld [vmem:[%s1 + $0x30] sm:$0xf]
  %v39 = vld [vmem:[%s1 + $0x34] sm:$0xf]
  %v40 = vld [vmem:[%s1 + $0x38] sm:$0xf]
  %v41 = vld [vmem:[%s1 + $0x3c] sm:$0xf]
  %v44 = vunpack.c.l.b16 %v24
  %v45 = vunpack.c.l.b16 %v25
  %v46 = vpack.c.b16 %v45, %v44
  %v64 = vunpack.c.l.b16 %v26
  %v65 = vunpack.c.l.b16 %v27
  %v66 = vunpack.c.l.b16 %v28
  %v67 = vunpack.c.l.b16 %v29
  %v68 = vunpack.c.l.b16 %v30
  %v69 = vunpack.c.l.b16 %v31
  %v70 = vunpack.c.l.b16 %v32
  %v71 = vunpack.c.l.b16 %v33
  %v72 = vunpack.c.l.b16 %v34
  %v73 = vunpack.c.l.b16 %v35
  %v74 = vunpack.c.l.b16 %v36
  %v75 = vunpack.c.l.b16 %v37
  %v76 = vunpack.c.l.b16 %v38
  %v77 = vunpack.c.l.b16 %v39
  %v78 = vunpack.c.l.b16 %v40
  %v79 = vunpack.c.l.b16 %v41
  %v80 = vpack.c.b16 %v65, %v64
  %v81 = vpack.c.b16 %v67, %v66
  %v82 = vpack.c.b16 %v69, %v68
  %v83 = vpack.c.b16 %v71, %v70
  %v84 = vpack.c.b16 %v73, %v72
  %v85 = vpack.c.b16 %v75, %v74
  %v86 = vpack.c.b16 %v77, %v76
  %v87 = vpack.c.b16 %v79, %v78
  %96 = vmatprep.subr.bf16.mxu0 0
  %97 = vmatpush1.bf16.msra.mxu0 %v80
  %98 = vmatprep.subr.bf16.mxu0 0
  %99 = vmatpush1.bf16.msra.mxu0 %v81
  %100 = vmatprep.subr.bf16.mxu0 0
  %101 = vmatpush1.bf16.msra.mxu0 %v82
  %102 = vmatprep.subr.bf16.mxu0 0
  %103 = vmatpush1.bf16.msra.mxu0 %v83
  %104 = vmatprep.subr.bf16.mxu0 0
  %105 = vmatpush1.bf16.msra.mxu0 %v84
  %106 = vmatprep.subr.bf16.mxu0 0
  %107 = vmatpush1.bf16.msra.mxu0 %v85
  %108 = vmatprep.subr.bf16.mxu0 0
  %109 = vmatpush1.bf16.msra.mxu0 %v86
  %110 = vmatprep.subr.bf16.mxu0 0
  %111 = vmatpush1.bf16.msra.mxu0 %v87
  %112 = vmatprep.subr.bf16.mxu0 0
  %113 = vmatpush1.bf16.msra.mxu0 0
  %114 = vmatprep.subr.bf16.mxu0 0
  %115 = vmatpush1.bf16.msra.mxu0 0
  %116 = vmatprep.subr.bf16.mxu0 0
  %117 = vmatpush1.bf16.msra.mxu0 0
  %118 = vmatprep.subr.bf16.mxu0 0
  %119 = vmatpush1.bf16.msra.mxu0 0
  %120 = vmatprep.subr.bf16.mxu0 0
  %121 = vmatpush1.bf16.msra.mxu0 0
  %122 = vmatprep.subr.bf16.mxu0 0
  %123 = vmatpush1.bf16.msra.mxu0 0
  %124 = vmatprep.subr.bf16.mxu0 0
  %125 = vmatpush1.bf16.msra.mxu0 0
  %126 = vmatprep.subr.bf16.mxu0 0
  %127 = vmatpush1.bf16.msra.mxu0 0
  %128 = vmatprep.mubr.bf16.mxu0 0
  %129 = vmatmul.mubr.bf16.gmra.mrb[0].mxu0 %v46
  %v130 = vpop.f32.mrb[0].mxu0
  %v131 = vadd.f32 0.0, %v130
  %v132 = vpop.f32.mrb[0].mxu0
  %v133 = vpop.f32.mrb[0].mxu0
  %v134 = vadd.f32 0.0, %v133
  %v135 = vpop.f32.mrb[0].mxu0
  %136 = vdwg.mxu0
  %v137 = vpack.c.bf16 %v134, %v131
  %v139 = vunpack.c.l.b16 %v137
  %v140 = vunpack.c.h.b16 %v137
  %v141 = vpack.c.b16 %v139, %v139
  %v142 = vpack.c.b16 %v140, %v140
  %145 = vst [vmem:[%s2] sm:$0xf] %v141
  %146 = vst [vmem:[%s2 + $0x4] sm:$0xf] %v142
  %v147 = vld [vmem:[%s3] sm:$0xff]
  %v148 = vld [vmem:[%s3 + $0x8] sm:$0xff]
  %149 = vadd.xlane.f32.xlu0 %v131
  %v150 = vpop.xlane.xlu0 %149
  %151 = vadd.xlane.f32.xlu0 %v134
  %v152 = vpop.xlane.xlu0 %151
  %v153 = vadd.f32 %v147, %v150
  %v154 = vadd.f32 %v148, %v152
  %vm155 = vcmask 7168
  %156 = vst.msk [vmem:[%s3] sm:$0xff] %vm155, %v153
  %157 = vst.msk [vmem:[%s3 + $0x8] sm:$0xff] %vm155, %v154
  %v158 = vld [vmem:[%s4] sm:$0xff]
  %v159 = vld [vmem:[%s4 + $0x8] sm:$0xff]
  %v160 = vmul.f32 %v131, %v131
  %v161 = vmul.f32 %v134, %v134
  %162 = vadd.xlane.f32.xlu0 %v160
  %v163 = vpop.xlane.xlu0 %162
  %164 = vadd.xlane.f32.xlu0 %v161
  %v165 = vpop.xlane.xlu0 %164
  %v166 = vadd.f32 %v158, %v163
  %v167 = vadd.f32 %v159, %v165
  %168 = vst.msk [vmem:[%s4] sm:$0xff] %vm155, %v166
  %169 = vst.msk [vmem:[%s4 + $0x8] sm:$0xff] %vm155, %v167
  // Predicated region
  $region14: #{generator_forward.28} parent=0 // pred_check
    _
  $region15: #{generator_forward.28} parent=0 // pred_check_branch
    %171 = sbr.rel (0) target = $region17
  $region16: #{generator_forward.28} parent=0 // pred_region
    _
  $region17: #{generator_forward.28} parent=0 // pred_fallthru
    _
  // Predicated region
  $region18: #{generator_forward.28} parent=0 // pred_check
    _
  $region19: #{generator_forward.28} parent=0 // pred_check_branch
    %173 = sbr.rel (0) target = $region21
  $region20: #{generator_forward.28} parent=0 // pred_region
    _
  $region21: #{generator_forward.28} parent=0 // pred_fallthru
    _
  // Predicated region
  $region22: #{generator_forward.28} parent=0 // pred_check
    _
  $region23: #{generator_forward.28} parent=0 // pred_check_branch
    %175 = sbr.rel (0) target = $region25
  $region24: #{generator_forward.28} parent=0 // pred_region
    _
  $region25: #{generator_forward.28} parent=0 // pred_fallthru
    _
  // Predicated region
  $region26: #{generator_forward.28} parent=0 // pred_check
    _
  $region27: #{generator_forward.28} parent=0 // pred_check_branch
    %177 = sbr.rel (0) target = $region29
  $region28: #{generator_forward.28} parent=0 // pred_region
    _
  $region29: #{generator_forward.28} parent=0 // pred_fallthru
    _
  // Predicated region
  $region30: #{generator_forward.28} parent=0 // pred_check
    _
  $region31: #{generator_forward.28} parent=0 // pred_check_branch
    %179 = sbr.rel (0) target = $region33
  $region32: #{generator_forward.28} parent=0 // pred_region
    _
  $region33: #{generator_forward.28} parent=0 // pred_fallthru
    _
  // Predicated region
  $region34: #{generator_forward.28} parent=0 // pred_check
    _
  $region35: #{generator_forward.28} parent=0 // pred_check_branch
    %181 = sbr.rel (0) target = $region37
  $region36: #{generator_forward.28} parent=0 // pred_region
    _
  $region37: #{generator_forward.28} parent=0 // pred_fallthru
    _

// kernel: generator_forward.32
$region0: #{generator_forward.32}
  #allocation0 [shape = 'u32[]', space=smem, size = 0x4, offset = 0x4, fixed_abs, tag = 'smem constant byte address 0x4 - core index']
  #allocation1 [shape = 'u32[144,128]{1,0:T(1,128)}', space=vmem, size = 0x12000, scoped, tag = 'internal scratch']
  %s0 = inlined_call_operand.vmem [shape: bf16[16,512], index: 0, kind: input, shape index: {}]
  %s1 = inlined_call_operand.vmem [shape: f32[16,1], index: 1, kind: input, shape index: {}]
  %s2 = inlined_call_operand.vmem [shape: f32[16,1], index: 2, kind: input, shape index: {}]
  %s3 = inlined_call_operand.vmem [shape: bf16[16,512], index: 3, kind: output, shape index: {}]
  %s4 = sld [smem:[#allocation0]]
  $region22: #{generator_forward.32} parent=0
    _
  %s6 = ssub.s32 1, %s4
  %s7 = scalar_select 0, %s6, %s4
  // Predicated region
  $region2: #{generator_forward.32} parent=0 // pred_check
    _
  $region3: #{generator_forward.32} parent=0 // pred_check_branch
    %9 = sbr.rel (0) target = $region5
  $region4: #{generator_forward.32} parent=0 // pred_region
    _
  $region5: #{generator_forward.32} parent=0 // pred_fallthru
    _
  // Predicated region
  $region6: #{generator_forward.32} parent=0 // pred_check
    _
  $region7: #{generator_forward.32} parent=0 // pred_check_branch
    %11 = sbr.rel (0) target = $region9
  $region8: #{generator_forward.32} parent=0 // pred_region
    _
  $region9: #{generator_forward.32} parent=0 // pred_fallthru
    _
  // Predicated region
  $region10: #{generator_forward.32} parent=0 // pred_check
    _
  $region11: #{generator_forward.32} parent=0 // pred_check_branch
    %13 = sbr.rel (0) target = $region13
  $region12: #{generator_forward.32} parent=0 // pred_region
    _
  $region13: #{generator_forward.32} parent=0 // pred_fallthru
    _
  %v14 = vld [vmem:[%s0] sm:$0xff]
  %v15 = vld [vmem:[%s0 + $0x8] sm:$0xff]
  %v16 = vld [vmem:[%s0 + $0x10] sm:$0xff]
  %v17 = vld [vmem:[%s0 + $0x18] sm:$0xff]
  %v18 = vunpack.c.l.bf16 %v14
  %v19 = vunpack.c.h.bf16 %v14
  %v20 = vunpack.c.l.bf16 %v15
  %v21 = vunpack.c.h.bf16 %v15
  %v22 = vunpack.c.l.bf16 %v16
  %v23 = vunpack.c.h.bf16 %v16
  %v24 = vunpack.c.l.bf16 %v17
  %v25 = vunpack.c.h.bf16 %v17
  %v26 = vld [vmem:[%s1] sm:$0xff]
  %v27 = vld [vmem:[%s1 + $0x8] sm:$0xff]
  %29 = vset.pattern.permute.xlu0 0
  %30 = vperm.xlu0 %29, %v26
  %v31 = vpop.permute.xlu0 %30
  %34 = vset.pattern.permute.xlu0 0
  %35 = vperm.xlu0 %34, %v27
  %v36 = vpop.permute.xlu0 %35
  %v38 = vmul.f32 %v18, %v31
  %v39 = vmul.f32 %v19, %v31
  %v40 = vmul.f32 %v20, %v31
  %v41 = vmul.f32 %v21, %v31
  %v42 = vmul.f32 %v22, %v36
  %v43 = vmul.f32 %v23, %v36
  %v44 = vmul.f32 %v24, %v36
  %v45 = vmul.f32 %v25, %v36
  %v46 = vld [vmem:[%s2] sm:$0xff]
  %v47 = vld [vmem:[%s2 + $0x8] sm:$0xff]
  %49 = vset.pattern.permute.xlu0 0
  %50 = vperm.xlu0 %49, %v46
  %v51 = vpop.permute.xlu0 %50
  %54 = vset.pattern.permute.xlu0 0
  %55 = vperm.xlu0 %54, %v47
  %v56 = vpop.permute.xlu0 %55
  %v58 = vadd.f32 %v38, %v51
  %v59 = vadd.f32 %v39, %v51
  %v60 = vadd.f32 %v40, %v51
  %v61 = vadd.f32 %v41, %v51
  %v62 = vadd.f32 %v42, %v56
  %v63 = vadd.f32 %v43, %v56
  %v64 = vadd.f32 %v44, %v56
  %v65 = vadd.f32 %v45, %v56
  %v66 = vmax.f32 %v58, 0.0
  %v67 = vmax.f32 %v59, 0.0
  %v68 = vmax.f32 %v60, 0.0
  %v69 = vmax.f32 %v61, 0.0
  %v70 = vmax.f32 %v62, 0.0
  %v71 = vmax.f32 %v63, 0.0
  %v72 = vmax.f32 %v64, 0.0
  %v73 = vmax.f32 %v65, 0.0
  %v74 = vpack.c.bf16 %v70, %v66
  %v75 = vpack.c.bf16 %v71, %v67
  %v76 = vpack.c.bf16 %v72, %v68
  %v77 = vpack.c.bf16 %v73, %v69
  %v82 = vunpack.c.l.b16 %v74
  %v83 = vunpack.c.l.b16 %v75
  %v84 = vunpack.c.l.b16 %v76
  %v85 = vunpack.c.l.b16 %v77
  %v86 = vunpack.c.h.b16 %v74
  %v87 = vunpack.c.h.b16 %v75
  %v88 = vunpack.c.h.b16 %v76
  %v89 = vunpack.c.h.b16 %v77
  %v90 = vpack.c.b16 %v83, %v82
  %v91 = vpack.c.b16 %v85, %v84
  %v92 = vpack.c.b16 %v87, %v86
  %v93 = vpack.c.b16 %v89, %v88
  %98 = vst [vmem:[%s3] sm:$0xff] %v90
  %99 = vst [vmem:[%s3 + $0x8] sm:$0xff] %v91
  %100 = vst [vmem:[%s3 + $0x10] sm:$0xff] %v92
  %101 = vst [vmem:[%s3 + $0x18] sm:$0xff] %v93
  // Predicated region
  $region14: #{generator_forward.32} parent=0 // pred_check
    _
  $region15: #{generator_forward.32} parent=0 // pred_check_branch
    %103 = sbr.rel (0) target = $region17
  $region16: #{generator_forward.32} parent=0 // pred_region
    _
  $region17: #{generator_forward.32} parent=0 // pred_fallthru
    _
  // Predicated region
  $region18: #{generator_forward.32} parent=0 // pred_check
    _
  $region19: #{generator_forward.32} parent=0 // pred_check_branch
    %105 = sbr.rel (0) target = $region21
  $region20: #{generator_forward.32} parent=0 // pred_region
    _
  $region21: #{generator_forward.32} parent=0 // pred_fallthru
    _

// kernel: generator_forward.33
$region0: #{generator_forward.33}
  #allocation0 [shape = 'u32[]', space=smem, size = 0x4, offset = 0x4, fixed_abs, tag = 'smem constant byte address 0x4 - core index']
  #allocation1 [shape = 'u32[144,128]{1,0:T(1,128)}', space=vmem, size = 0x12000, scoped, tag = 'internal scratch']
  %s0 = inlined_call_operand.vmem [shape: bf16[8,64], index: 0, kind: input, shape index: {}]
  %s1 = inlined_call_operand.vmem [shape: bf16[64,512], index: 1, kind: input, shape index: {}]
  %s2 = inlined_call_operand.vmem [shape: bf16[8,512], index: 2, kind: output, shape index: {0}]
  %s3 = inlined_call_operand.vmem [shape: f32[8,1], index: 3, kind: output, shape index: {1}]
  %s4 = inlined_call_operand.vmem [shape: f32[8,1], index: 4, kind: output, shape index: {2}]
  %5 = xla_tuple %s2, %s3, %s4
  %s6 = sld [smem:[#allocation0]]
  $region38: #{generator_forward.33} parent=0
    _
  %s8 = ssub.s32 1, %s6
  %s9 = scalar_select 0, %s8, %s6
  // Predicated region
  $region2: #{generator_forward.33} parent=0 // pred_check
    _
  $region3: #{generator_forward.33} parent=0 // pred_check_branch
    %11 = sbr.rel (0) target = $region5
  $region4: #{generator_forward.33} parent=0 // pred_region
    _
  $region5: #{generator_forward.33} parent=0 // pred_fallthru
    _
  // Predicated region
  $region6: #{generator_forward.33} parent=0 // pred_check
    _
  $region7: #{generator_forward.33} parent=0 // pred_check_branch
    %13 = sbr.rel (0) target = $region9
  $region8: #{generator_forward.33} parent=0 // pred_region
    _
  $region9: #{generator_forward.33} parent=0 // pred_fallthru
    _
  %p15 = scmp.eq.s32.totalorder 0, 0
  // Predicated region
  $region10: #{generator_forward.33} parent=0 // pred_check
    %p16 = pneg %p15
  $region11: #{generator_forward.33} parent=0 // pred_check_branch
    %18 = sbr.rel (%p16) target = $region13
  $region12: #{generator_forward.33} parent=0 // pred_region
    %vm19 = vcmask 7168
    %20 = vst.msk [vmem:[%s3] sm:$0xff] %vm19, 0.0
    %21 = vst.msk [vmem:[%s4] sm:$0xff] %vm19, 0.0
  $region13: #{generator_forward.33} parent=0 // pred_fallthru
    _
  %v22 = vld [vmem:[%s0] sm:$0xf]
  %v23 = vld [vmem:[%s1] sm:$0xff]
  %v24 = vld [vmem:[%s1 + $0x8] sm:$0xff]
  %v25 = vld [vmem:[%s1 + $0x10] sm:$0xff]
  %v26 = vld [vmem:[%s1 + $0x18] sm:$0xff]
  %v27 = vld [vmem:[%s1 + $0x20] sm:$0xff]
  %v28 = vld [vmem:[%s1 + $0x28] sm:$0xff]
  %v29 = vld [vmem:[%s1 + $0x30] sm:$0xff]
  %v30 = vld [vmem:[%s1 + $0x38] sm:$0xff]
  %v31 = vld [vmem:[%s1 + $0x40] sm:$0xff]
  %v32 = vld [vmem:[%s1 + $0x48] sm:$0xff]
  %v33 = vld [vmem:[%s1 + $0x50] sm:$0xff]
  %v34 = vld [vmem:[%s1 + $0x58] sm:$0xff]
  %v35 = vld [vmem:[%s1 + $0x60] sm:$0xff]
  %v36 = vld [vmem:[%s1 + $0x68] sm:$0xff]
  %v37 = vld [vmem:[%s1 + $0x70] sm:$0xff]
  %v38 = vld [vmem:[%s1 + $0x78] sm:$0xff]
  %v55 = vunpack.c.l.b16 %v23
  %v56 = vunpack.c.h.b16 %v23
  %v57 = vunpack.c.l.b16 %v24
  %v58 = vunpack.c.h.b16 %v24
  %v59 = vunpack.c.l.b16 %v25
  %v60 = vunpack.c.h.b16 %v25
  %v61 = vunpack.c.l.b16 %v26
  %v62 = vunpack.c.h.b16 %v26
  %v63 = vunpack.c.l.b16 %v27
  %v64 = vunpack.c.h.b16 %v27
  %v65 = vunpack.c.l.b16 %v28
  %v66 = vunpack.c.h.b16 %v28
  %v67 = vunpack.c.l.b16 %v29
  %v68 = vunpack.c.h.b16 %v29
  %v69 = vunpack.c.l.b16 %v30
  %v70 = vunpack.c.h.b16 %v30
  %v71 = vunpack.c.l.b16 %v31
  %v72 = vunpack.c.h.b16 %v31
  %v73 = vunpack.c.l.b16 %v32
  %v74 = vunpack.c.h.b16 %v32
  %v75 = vunpack.c.l.b16 %v33
  %v76 = vunpack.c.h.b16 %v33
  %v77 = vunpack.c.l.b16 %v34
  %v78 = vunpack.c.h.b16 %v34
  %v79 = vunpack.c.l.b16 %v35
  %v80 = vunpack.c.h.b16 %v35
  %v81 = vunpack.c.l.b16 %v36
  %v82 = vunpack.c.h.b16 %v36
  %v83 = vunpack.c.l.b16 %v37
  %v84 = vunpack.c.h.b16 %v37
  %v85 = vunpack.c.l.b16 %v38
  %v86 = vunpack.c.h.b16 %v38
  %v87 = vpack.c.b16 %v59, %v55
  %v88 = vpack.c.b16 %v60, %v56
  %v89 = vpack.c.b16 %v61, %v57
  %v90 = vpack.c.b16 %v62, %v58
  %v91 = vpack.c.b16 %v67, %v63
  %v92 = vpack.c.b16 %v68, %v64
  %v93 = vpack.c.b16 %v69, %v65
  %v94 = vpack.c.b16 %v70, %v66
  %v95 = vpack.c.b16 %v75, %v71
  %v96 = vpack.c.b16 %v76, %v72
  %v97 = vpack.c.b16 %v77, %v73
  %v98 = vpack.c.b16 %v78, %v74
  %v99 = vpack.c.b16 %v83, %v79
  %v100 = vpack.c.b16 %v84, %v80
  %v101 = vpack.c.b16 %v85, %v81
  %v102 = vpack.c.b16 %v86, %v82
  %vm119 = vcmask 523264
  %v121 = vsel %vm119, %v22, 0
  %123 = vmatprep.subr.bf16.mxu0 %v88
  %124 = vmatpush1.bf16.msra.mxu0 %v87
  %125 = vmatprep.subr.bf16.mxu0 %v92
  %126 = vmatpush1.bf16.msra.mxu0 %v91
  %127 = vmatprep.subr.bf16.mxu0 %v96
  %128 = vmatpush1.bf16.msra.mxu0 %v95
  %129 = vmatprep.subr.bf16.mxu0 %v100
  %130 = vmatpush1.bf16.msra.mxu0 %v99
  %131 = vmatprep.subr.bf16.mxu0 0
  %132 = vmatpush1.bf16.msra.mxu0 0
  %133 = vmatprep.subr.bf16.mxu0 0
  %134 = vmatpush1.bf16.msra.mxu0 0
  %135 = vmatprep.subr.bf16.mxu0 0
  %136 = vmatpush1.bf16.msra.mxu0 0
  %137 = vmatprep.subr.bf16.mxu0 0
  %138 = vmatpush1.bf16.msra.mxu0 0
  %139 = vmatprep.subr.bf16.mxu0 0
  %140 = vmatpush1.bf16.msra.mxu0 0
  %141 = vmatprep.subr.bf16.mxu0 0
  %142 = vmatpush1.bf16.msra.mxu0 0
  %143 = vmatprep.subr.bf16.mxu0 0
  %144 = vmatpush1.bf16.msra.mxu0 0
  %145 = vmatprep.subr.bf16.mxu0 0
  %146 = vmatpush1.bf16.msra.mxu0 0
  %147 = vmatprep.subr.bf16.mxu0 0
  %148 = vmatpush1.bf16.msra.mxu0 0
  %149 = vmatprep.subr.bf16.mxu0 0
  %150 = vmatpush1.bf16.msra.mxu0 0
  %151 = vmatprep.subr.bf16.mxu0 0
  %152 = vmatpush1.bf16.msra.mxu0 0
  %153 = vmatprep.subr.bf16.mxu0 0
  %154 = vmatpush1.bf16.msra.mxu0 0
  %155 = vmatprep.mubr.bf16.mxu0 0
  %156 = vmatmul.mubr.bf16.gmra.mrb[0].mxu0 %v121
  %v157 = vpop.f32.mrb[0].mxu0
  %v158 = vadd.f32 0.0, %v157
  %v159 = vpop.f32.mrb[0].mxu0
  %v160 = vadd.f32 0.0, %v159
  %v161 = vpop.f32.mrb[0].mxu0
  %v162 = vpop.f32.mrb[0].mxu0
  %163 = vdwg.mxu0
  %164 = vmatprep.subr.bf16.mxu0 %v90
  %165 = vmatpush1.bf16.msra.mxu0 %v89
  %166 = vmatprep.subr.bf16.mxu0 %v94
  %167 = vmatpush1.bf16.msra.mxu0 %v93
  %168 = vmatprep.subr.bf16.mxu0 %v98
  %169 = vmatpush1.bf16.msra.mxu0 %v97
  %170 = vmatprep.subr.bf16.mxu0 %v102
  %171 = vmatpush1.bf16.msra.mxu0 %v101
  %172 = vmatprep.subr.bf16.mxu0 0
  %173 = vmatpush1.bf16.msra.mxu0 0
  %174 = vmatprep.subr.bf16.mxu0 0
  %175 = vmatpush1.bf16.msra.mxu0 0
  %176 = vmatprep.subr.bf16.mxu0 0
  %177 = vmatpush1.bf16.msra.mxu0 0
  %178 = vmatprep.subr.bf16.mxu0 0
  %179 = vmatpush1.bf16.msra.mxu0 0
  %180 = vmatprep.subr.bf16.mxu0 0
  %181 = vmatpush1.bf16.msra.mxu0 0
  %182 = vmatprep.subr.bf16.mxu0 0
  %183 = vmatpush1.bf16.msra.mxu0 0
  %184 = vmatprep.subr.bf16.mxu0 0
  %185 = vmatpush1.bf16.msra.mxu0 0
  %186 = vmatprep.subr.bf16.mxu0 0
  %187 = vmatpush1.bf16.msra.mxu0 0
  %188 = vmatprep.subr.bf16.mxu0 0
  %189 = vmatpush1.bf16.msra.mxu0 0
  %190 = vmatprep.subr.bf16.mxu0 0
  %191 = vmatpush1.bf16.msra.mxu0 0
  %192 = vmatprep.subr.bf16.mxu0 0
  %193 = vmatpush1.bf16.msra.mxu0 0
  %194 = vmatprep.subr.bf16.mxu0 0
  %195 = vmatpush1.bf16.msra.mxu0 0
  %196 = vmatprep.mubr.bf16.mxu0 0
  %197 = vmatmul.mubr.bf16.gmra.mrb[0].mxu0 %v121
  %v198 = vpop.f32.mrb[0].mxu0
  %v199 = vadd.f32 0.0, %v198
  %v200 = vpop.f32.mrb[0].mxu0
  %v201 = vadd.f32 0.0, %v200
  %v202 = vpop.f32.mrb[0].mxu0
  %v203 = vpop.f32.mrb[0].mxu0
  %204 = vdwg.mxu0
  %v205 = vpack.c.bf16 %v158, %v158
  %v206 = vpack.c.bf16 %v160, %v160
  %v207 = vpack.c.bf16 %v199, %v199
  %v208 = vpack.c.bf16 %v201, %v201
  %v213 = vunpack.c.l.b16 %v205
  %v214 = vunpack.c.l.b16 %v206
  %v215 = vunpack.c.l.b16 %v207
  %v216 = vunpack.c.l.b16 %v208
  %v217 = vpack.c.b16 %v214, %v213
  %v218 = vpack.c.b16 %v216, %v215
  %221 = vst [vmem:[%s2] sm:$0xff] %v217
  %222 = vst [vmem:[%s2 + $0x8] sm:$0xff] %v218
  %v223 = vld [vmem:[%s3] sm:$0xff]
  %v224 = vadd.f32 %v158, %v160
  %v225 = vadd.f32 %v224, %v199
  %v226 = vadd.f32 %v225, %v201
  %227 = vadd.xlane.f32.xlu0 %v226
  %v228 = vpop.xlane.xlu0 %227
  %v229 = vadd.f32 %v223, %v228
  %vm230 = vcmask 7168
  %231 = vst.msk [vmem:[%s3] sm:$0xff] %vm230, %v229
  %v232 = vld [vmem:[%s4] sm:$0xff]
  %v233 = vmul.f32 %v158, %v158
  %v234 = vmul.f32 %v160, %v160
  %v235 = vmul.f32 %v199, %v199
  %v236 = vmul.f32 %v201, %v201
  %v237 = vadd.f32 %v233, %v234
  %v238 = vadd.f32 %v237, %v235
  %v239 = vadd.f32 %v238, %v236
  %240 = vadd.xlane.f32.xlu0 %v239
  %v241 = vpop.xlane.xlu0 %240
  %v242 = vadd.f32 %v232, %v241
  %243 = vst.msk [vmem:[%s4] sm:$0xff] %vm230, %v242
  // Predicated region
  $region14: #{generator_forward.33} parent=0 // pred_check
    _
  $region15: #{generator_forward.33} parent=0 // pred_check_branch
    %245 = sbr.rel (0) target = $region17
  $region16: #{generator_forward.33} parent=0 // pred_region
    _
  $region17: #{generator_forward.33} parent=0 // pred_fallthru
    _
  // Predicated region
  $region18: #{generator_forward.33} parent=0 // pred_check
    _
  $region19: #{generator_forward.33} parent=0 // pred_check_branch
    %247 = sbr.rel (0) target = $region21
  $region20: #{generator_forward.33} parent=0 // pred_region
    _
  $region21: #{generator_forward.33} parent=0 // pred_fallthru
    _
  // Predicated region
  $region22: #{generator_forward.33} parent=0 // pred_check
    _
  $region23: #{generator_forward.33} parent=0 // pred_check_branch
    %249 = sbr.rel (0) target = $region25
  $region24: #{generator_forward.33} parent=0 // pred_region
    _
  $region25: #{generator_forward.33} parent=0 // pred_fallthru
    _
  // Predicated region
  $region26: #{generator_forward.33} parent=0 // pred_check
    _
  $region27: #{generator_forward.33} parent=0 // pred_check_branch
    %251 = sbr.rel (0) target = $region29
  $region28: #{generator_forward.33} parent=0 // pred_region
    _
  $region29: #{generator_forward.33} parent=0 // pred_fallthru
    _
  // Predicated region
  $region30: #{generator_forward.33} parent=0 // pred_check
    _
  $region31: #{generator_forward.33} parent=0 // pred_check_branch
    %253 = sbr.rel (0) target = $region33
  $region32: #{generator_forward.33} parent=0 // pred_region
    _
  $region33: #{generator_forward.33} parent=0 // pred_fallthru
    _
  // Predicated region
  $region34: #{generator_forward.33} parent=0 // pred_check
    _
  $region35: #{generator_forward.33} parent=0 // pred_check_branch
    %255 = sbr.rel (0) target = $region37
  $region36: #{generator_forward.33} parent=0 // pred_region
    _
  $region37: #{generator_forward.33} parent=0 // pred_fallthru
    _

// kernel: generator_forward.37
$region0: #{generator_forward.37}
  #allocation0 [shape = 'u32[]', space=smem, size = 0x4, offset = 0x4, fixed_abs, tag = 'smem constant byte address 0x4 - core index']
  #allocation1 [shape = 'u32[144,128]{1,0:T(1,128)}', space=vmem, size = 0x12000, scoped, tag = 'internal scratch']
  %s0 = inlined_call_operand.vmem [shape: bf16[8,2048], index: 0, kind: input, shape index: {}]
  %s1 = inlined_call_operand.vmem [shape: f32[8,1], index: 1, kind: input, shape index: {}]
  %s2 = inlined_call_operand.vmem [shape: f32[8,1], index: 2, kind: input, shape index: {}]
  %s3 = inlined_call_operand.vmem [shape: bf16[8,2048], index: 3, kind: output, shape index: {}]
  %s4 = sld [smem:[#allocation0]]
  $region22: #{generator_forward.37} parent=0
    _
  %s6 = ssub.s32 1, %s4
  %s7 = scalar_select 0, %s6, %s4
  // Predicated region
  $region2: #{generator_forward.37} parent=0 // pred_check
    _
  $region3: #{generator_forward.37} parent=0 // pred_check_branch
    %9 = sbr.rel (0) target = $region5
  $region4: #{generator_forward.37} parent=0 // pred_region
    _
  $region5: #{generator_forward.37} parent=0 // pred_fallthru
    _
  // Predicated region
  $region6: #{generator_forward.37} parent=0 // pred_check
    _
  $region7: #{generator_forward.37} parent=0 // pred_check_branch
    %11 = sbr.rel (0) target = $region9
  $region8: #{generator_forward.37} parent=0 // pred_region
    _
  $region9: #{generator_forward.37} parent=0 // pred_fallthru
    _
  // Predicated region
  $region10: #{generator_forward.37} parent=0 // pred_check
    _
  $region11: #{generator_forward.37} parent=0 // pred_check_branch
    %13 = sbr.rel (0) target = $region13
  $region12: #{generator_forward.37} parent=0 // pred_region
    _
  $region13: #{generator_forward.37} parent=0 // pred_fallthru
    _
  %v14 = vld [vmem:[%s0] sm:$0xff]
  %v15 = vld [vmem:[%s0 + $0x8] sm:$0xff]
  %v16 = vld [vmem:[%s0 + $0x10] sm:$0xff]
  %v17 = vld [vmem:[%s0 + $0x18] sm:$0xff]
  %v18 = vld [vmem:[%s0 + $0x20] sm:$0xff]
  %v19 = vld [vmem:[%s0 + $0x28] sm:$0xff]
  %v20 = vld [vmem:[%s0 + $0x30] sm:$0xff]
  %v21 = vld [vmem:[%s0 + $0x38] sm:$0xff]
  %v22 = vunpack.c.l.bf16 %v14
  %v23 = vunpack.c.h.bf16 %v14
  %v24 = vunpack.c.l.bf16 %v15
  %v25 = vunpack.c.h.bf16 %v15
  %v26 = vunpack.c.l.bf16 %v16
  %v27 = vunpack.c.h.bf16 %v16
  %v28 = vunpack.c.l.bf16 %v17
  %v29 = vunpack.c.h.bf16 %v17
  %v30 = vunpack.c.l.bf16 %v18
  %v31 = vunpack.c.h.bf16 %v18
  %v32 = vunpack.c.l.bf16 %v19
  %v33 = vunpack.c.h.bf16 %v19
  %v34 = vunpack.c.l.bf16 %v20
  %v35 = vunpack.c.h.bf16 %v20
  %v36 = vunpack.c.l.bf16 %v21
  %v37 = vunpack.c.h.bf16 %v21
  %v38 = vld [vmem:[%s1] sm:$0xff]
  %40 = vset.pattern.permute.xlu0 0
  %41 = vperm.xlu0 %40, %v38
  %v42 = vpop.permute.xlu0 %41
  %v44 = vmul.f32 %v22, %v42
  %v45 = vmul.f32 %v23, %v42
  %v46 = vmul.f32 %v24, %v42
  %v47 = vmul.f32 %v25, %v42
  %v48 = vmul.f32 %v26, %v42
  %v49 = vmul.f32 %v27, %v42
  %v50 = vmul.f32 %v28, %v42
  %v51 = vmul.f32 %v29, %v42
  %v52 = vmul.f32 %v30, %v42
  %v53 = vmul.f32 %v31, %v42
  %v54 = vmul.f32 %v32, %v42
  %v55 = vmul.f32 %v33, %v42
  %v56 = vmul.f32 %v34, %v42
  %v57 = vmul.f32 %v35, %v42
  %v58 = vmul.f32 %v36, %v42
  %v59 = vmul.f32 %v37, %v42
  %v60 = vld [vmem:[%s2] sm:$0xff]
  %62 = vset.pattern.permute.xlu0 0
  %63 = vperm.xlu0 %62, %v60
  %v64 = vpop.permute.xlu0 %63
  %v66 = vadd.f32 %v44, %v64
  %v67 = vadd.f32 %v45, %v64
  %v68 = vadd.f32 %v46, %v64
  %v69 = vadd.f32 %v47, %v64
  %v70 = vadd.f32 %v48, %v64
  %v71 = vadd.f32 %v49, %v64
  %v72 = vadd.f32 %v50, %v64
  %v73 = vadd.f32 %v51, %v64
  %v74 = vadd.f32 %v52, %v64
  %v75 = vadd.f32 %v53, %v64
  %v76 = vadd.f32 %v54, %v64
  %v77 = vadd.f32 %v55, %v64
  %v78 = vadd.f32 %v56, %v64
  %v79 = vadd.f32 %v57, %v64
  %v80 = vadd.f32 %v58, %v64
  %v81 = vadd.f32 %v59, %v64
  %v82 = vmax.f32 %v66, 0.0
  %v83 = vmax.f32 %v67, 0.0
  %v84 = vmax.f32 %v68, 0.0
  %v85 = vmax.f32 %v69, 0.0
  %v86 = vmax.f32 %v70, 0.0
  %v87 = vmax.f32 %v71, 0.0
  %v88 = vmax.f32 %v72, 0.0
  %v89 = vmax.f32 %v73, 0.0
  %v90 = vmax.f32 %v74, 0.0
  %v91 = vmax.f32 %v75, 0.0
  %v92 = vmax.f32 %v76, 0.0
  %v93 = vmax.f32 %v77, 0.0
  %v94 = vmax.f32 %v78, 0.0
  %v95 = vmax.f32 %v79, 0.0
  %v96 = vmax.f32 %v80, 0.0
  %v97 = vmax.f32 %v81, 0.0
  %v98 = vpack.c.bf16 %v82, %v82
  %v99 = vpack.c.bf16 %v83, %v83
  %v100 = vpack.c.bf16 %v84, %v84
  %v101 = vpack.c.bf16 %v85, %v85
  %v102 = vpack.c.bf16 %v86, %v86
  %v103 = vpack.c.bf16 %v87, %v87
  %v104 = vpack.c.bf16 %v88, %v88
  %v105 = vpack.c.bf16 %v89, %v89
  %v106 = vpack.c.bf16 %v90, %v90
  %v107 = vpack.c.bf16 %v91, %v91
  %v108 = vpack.c.bf16 %v92, %v92
  %v109 = vpack.c.bf16 %v93, %v93
  %v110 = vpack.c.bf16 %v94, %v94
  %v111 = vpack.c.bf16 %v95, %v95
  %v112 = vpack.c.bf16 %v96, %v96
  %v113 = vpack.c.bf16 %v97, %v97
  %v130 = vunpack.c.l.b16 %v98
  %v131 = vunpack.c.l.b16 %v99
  %v132 = vunpack.c.l.b16 %v100
  %v133 = vunpack.c.l.b16 %v101
  %v134 = vunpack.c.l.b16 %v102
  %v135 = vunpack.c.l.b16 %v103
  %v136 = vunpack.c.l.b16 %v104
  %v137 = vunpack.c.l.b16 %v105
  %v138 = vunpack.c.l.b16 %v106
  %v139 = vunpack.c.l.b16 %v107
  %v140 = vunpack.c.l.b16 %v108
  %v141 = vunpack.c.l.b16 %v109
  %v142 = vunpack.c.l.b16 %v110
  %v143 = vunpack.c.l.b16 %v111
  %v144 = vunpack.c.l.b16 %v112
  %v145 = vunpack.c.l.b16 %v113
  %v146 = vpack.c.b16 %v131, %v130
  %v147 = vpack.c.b16 %v133, %v132
  %v148 = vpack.c.b16 %v135, %v134
  %v149 = vpack.c.b16 %v137, %v136
  %v150 = vpack.c.b16 %v139, %v138
  %v151 = vpack.c.b16 %v141, %v140
  %v152 = vpack.c.b16 %v143, %v142
  %v153 = vpack.c.b16 %v145, %v144
  %162 = vst [vmem:[%s3] sm:$0xff] %v146
  %163 = vst [vmem:[%s3 + $0x8] sm:$0xff] %v147
  %164 = vst [vmem:[%s3 + $0x10] sm:$0xff] %v148
  %165 = vst [vmem:[%s3 + $0x18] sm:$0xff] %v149
  %166 = vst [vmem:[%s3 + $0x20] sm:$0xff] %v150
  %167 = vst [vmem:[%s3 + $0x28] sm:$0xff] %v151
  %168 = vst [vmem:[%s3 + $0x30] sm:$0xff] %v152
  %169 = vst [vmem:[%s3 + $0x38] sm:$0xff] %v153
  // Predicated region
  $region14: #{generator_forward.37} parent=0 // pred_check
    _
  $region15: #{generator_forward.37} parent=0 // pred_check_branch
    %171 = sbr.rel (0) target = $region17
  $region16: #{generator_forward.37} parent=0 // pred_region
    _
  $region17: #{generator_forward.37} parent=0 // pred_fallthru
    _
  // Predicated region
  $region18: #{generator_forward.37} parent=0 // pred_check
    _
  $region19: #{generator_forward.37} parent=0 // pred_check_branch
    %173 = sbr.rel (0) target = $region21
  $region20: #{generator_forward.37} parent=0 // pred_region
    _
  $region21: #{generator_forward.37} parent=0 // pred_fallthru
    _

// kernel: generator_forward.38
$region0: #{generator_forward.38}
  #allocation0 [shape = 'u32[]', space=smem, size = 0x4, offset = 0x4, fixed_abs, tag = 'smem constant byte address 0x4 - core index']
  #allocation1 [shape = 'u32[144,128]{1,0:T(1,128)}', space=vmem, size = 0x12000, scoped, tag = 'internal scratch']
  %s0 = inlined_call_operand.vmem [shape: bf16[3,32], index: 0, kind: input, shape index: {}]
  %s1 = inlined_call_operand.vmem [shape: bf16[32,2048], index: 1, kind: input, shape index: {}]
  %s2 = inlined_call_operand.vmem [shape: f32[3,2048], index: 2, kind: output, shape index: {}]
  %s3 = sld [smem:[#allocation0]]
  $region18: #{generator_forward.38} parent=0
    _
  %s5 = ssub.s32 1, %s3
  %s6 = scalar_select 0, %s5, %s3
  // Predicated region
  $region2: #{generator_forward.38} parent=0 // pred_check
    _
  $region3: #{generator_forward.38} parent=0 // pred_check_branch
    %8 = sbr.rel (0) target = $region5
  $region4: #{generator_forward.38} parent=0 // pred_region
    _
  $region5: #{generator_forward.38} parent=0 // pred_fallthru
    _
  // Predicated region
  $region6: #{generator_forward.38} parent=0 // pred_check
    _
  $region7: #{generator_forward.38} parent=0 // pred_check_branch
    %10 = sbr.rel (0) target = $region9
  $region8: #{generator_forward.38} parent=0 // pred_region
    _
  $region9: #{generator_forward.38} parent=0 // pred_fallthru
    _
  %v12 = vld [vmem:[%s0] sm:$0x3]
  %v13 = vld [vmem:[%s1] sm:$0xff]
  %v14 = vld [vmem:[%s1 + $0x8] sm:$0xff]
  %v15 = vld [vmem:[%s1 + $0x10] sm:$0xff]
  %v16 = vld [vmem:[%s1 + $0x18] sm:$0xff]
  %v17 = vld [vmem:[%s1 + $0x20] sm:$0xff]
  %v18 = vld [vmem:[%s1 + $0x28] sm:$0xff]
  %v19 = vld [vmem:[%s1 + $0x30] sm:$0xff]
  %v20 = vld [vmem:[%s1 + $0x38] sm:$0xff]
  %v21 = vld [vmem:[%s1 + $0x40] sm:$0xff]
  %v22 = vld [vmem:[%s1 + $0x48] sm:$0xff]
  %v23 = vld [vmem:[%s1 + $0x50] sm:$0xff]
  %v24 = vld [vmem:[%s1 + $0x58] sm:$0xff]
  %v25 = vld [vmem:[%s1 + $0x60] sm:$0xff]
  %v26 = vld [vmem:[%s1 + $0x68] sm:$0xff]
  %v27 = vld [vmem:[%s1 + $0x70] sm:$0xff]
  %v28 = vld [vmem:[%s1 + $0x78] sm:$0xff]
  %v29 = vld [vmem:[%s1 + $0x80] sm:$0xff]
  %v30 = vld [vmem:[%s1 + $0x88] sm:$0xff]
  %v31 = vld [vmem:[%s1 + $0x90] sm:$0xff]
  %v32 = vld [vmem:[%s1 + $0x98] sm:$0xff]
  %v33 = vld [vmem:[%s1 + $0xa0] sm:$0xff]
  %v34 = vld [vmem:[%s1 + $0xa8] sm:$0xff]
  %v35 = vld [vmem:[%s1 + $0xb0] sm:$0xff]
  %v36 = vld [vmem:[%s1 + $0xb8] sm:$0xff]
  %v37 = vld [vmem:[%s1 + $0xc0] sm:$0xff]
  %v38 = vld [vmem:[%s1 + $0xc8] sm:$0xff]
  %v39 = vld [vmem:[%s1 + $0xd0] sm:$0xff]
  %v40 = vld [vmem:[%s1 + $0xd8] sm:$0xff]
  %v41 = vld [vmem:[%s1 + $0xe0] sm:$0xff]
  %v42 = vld [vmem:[%s1 + $0xe8] sm:$0xff]
  %v43 = vld [vmem:[%s1 + $0xf0] sm:$0xff]
  %v44 = vld [vmem:[%s1 + $0xf8] sm:$0xff]
  %v77 = vunpack.c.l.b16 %v13
  %v78 = vunpack.c.h.b16 %v13
  %v79 = vunpack.c.l.b16 %v14
  %v80 = vunpack.c.h.b16 %v14
  %v81 = vunpack.c.l.b16 %v15
  %v82 = vunpack.c.h.b16 %v15
  %v83 = vunpack.c.l.b16 %v16
  %v84 = vunpack.c.h.b16 %v16
  %v85 = vunpack.c.l.b16 %v17
  %v86 = vunpack.c.h.b16 %v17
  %v87 = vunpack.c.l.b16 %v18
  %v88 = vunpack.c.h.b16 %v18
  %v89 = vunpack.c.l.b16 %v19
  %v90 = vunpack.c.h.b16 %v19
  %v91 = vunpack.c.l.b16 %v20
  %v92 = vunpack.c.h.b16 %v20
  %v93 = vunpack.c.l.b16 %v21
  %v94 = vunpack.c.h.b16 %v21
  %v95 = vunpack.c.l.b16 %v22
  %v96 = vunpack.c.h.b16 %v22
  %v97 = vunpack.c.l.b16 %v23
  %v98 = vunpack.c.h.b16 %v23
  %v99 = vunpack.c.l.b16 %v24
  %v100 = vunpack.c.h.b16 %v24
  %v101 = vunpack.c.l.b16 %v25
  %v102 = vunpack.c.h.b16 %v25
  %v103 = vunpack.c.l.b16 %v26
  %v104 = vunpack.c.h.b16 %v26
  %v105 = vunpack.c.l.b16 %v27
  %v106 = vunpack.c.h.b16 %v27
  %v107 = vunpack.c.l.b16 %v28
  %v108 = vunpack.c.h.b16 %v28
  %v109 = vunpack.c.l.b16 %v29
  %v110 = vunpack.c.h.b16 %v29
  %v111 = vunpack.c.l.b16 %v30
  %v112 = vunpack.c.h.b16 %v30
  %v113 = vunpack.c.l.b16 %v31
  %v114 = vunpack.c.h.b16 %v31
  %v115 = vunpack.c.l.b16 %v32
  %v116 = vunpack.c.h.b16 %v32
  %v117 = vunpack.c.l.b16 %v33
  %v118 = vunpack.c.h.b16 %v33
  %v119 = vunpack.c.l.b16 %v34
  %v120 = vunpack.c.h.b16 %v34
  %v121 = vunpack.c.l.b16 %v35
  %v122 = vunpack.c.h.b16 %v35
  %v123 = vunpack.c.l.b16 %v36
  %v124 = vunpack.c.h.b16 %v36
  %v125 = vunpack.c.l.b16 %v37
  %v126 = vunpack.c.h.b16 %v37
  %v127 = vunpack.c.l.b16 %v38
  %v128 = vunpack.c.h.b16 %v38
  %v129 = vunpack.c.l.b16 %v39
  %v130 = vunpack.c.h.b16 %v39
  %v131 = vunpack.c.l.b16 %v40
  %v132 = vunpack.c.h.b16 %v40
  %v133 = vunpack.c.l.b16 %v41
  %v134 = vunpack.c.h.b16 %v41
  %v135 = vunpack.c.l.b16 %v42
  %v136 = vunpack.c.h.b16 %v42
  %v137 = vunpack.c.l.b16 %v43
  %v138 = vunpack.c.h.b16 %v43
  %v139 = vunpack.c.l.b16 %v44
  %v140 = vunpack.c.h.b16 %v44
  %v141 = vpack.c.b16 %v93, %v77
  %v142 = vpack.c.b16 %v94, %v78
  %v143 = vpack.c.b16 %v95, %v79
  %v144 = vpack.c.b16 %v96, %v80
  %v145 = vpack.c.b16 %v97, %v81
  %v146 = vpack.c.b16 %v98, %v82
  %v147 = vpack.c.b16 %v99, %v83
  %v148 = vpack.c.b16 %v100, %v84
  %v149 = vpack.c.b16 %v101, %v85
  %v150 = vpack.c.b16 %v102, %v86
  %v151 = vpack.c.b16 %v103, %v87
  %v152 = vpack.c.b16 %v104, %v88
  %v153 = vpack.c.b16 %v105, %v89
  %v154 = vpack.c.b16 %v106, %v90
  %v155 = vpack.c.b16 %v107, %v91
  %v156 = vpack.c.b16 %v108, %v92
  %v157 = vpack.c.b16 %v125, %v109
  %v158 = vpack.c.b16 %v126, %v110
  %v159 = vpack.c.b16 %v127, %v111
  %v160 = vpack.c.b16 %v128, %v112
  %v161 = vpack.c.b16 %v129, %v113
  %v162 = vpack.c.b16 %v130, %v114
  %v163 = vpack.c.b16 %v131, %v115
  %v164 = vpack.c.b16 %v132, %v116
  %v165 = vpack.c.b16 %v133, %v117
  %v166 = vpack.c.b16 %v134, %v118
  %v167 = vpack.c.b16 %v135, %v119
  %v168 = vpack.c.b16 %v136, %v120
  %v169 = vpack.c.b16 %v137, %v121
  %v170 = vpack.c.b16 %v138, %v122
  %v171 = vpack.c.b16 %v139, %v123
  %v172 = vpack.c.b16 %v140, %v124
  %vm205 = vcmask 261120
  %v207 = vsel %vm205, %v12, 0
  %209 = vmatprep.subr.bf16.mxu0 %v142
  %210 = vmatpush1.bf16.msra.mxu0 %v141
  %211 = vmatprep.subr.bf16.mxu0 %v158
  %212 = vmatpush1.bf16.msra.mxu0 %v157
  %213 = vmatprep.subr.bf16.mxu0 0
  %214 = vmatpush1.bf16.msra.mxu0 0
  %215 = vmatprep.subr.bf16.mxu0 0
  %216 = vmatpush1.bf16.msra.mxu0 0
  %217 = vmatprep.subr.bf16.mxu0 0
  %218 = vmatpush1.bf16.msra.mxu0 0
  %219 = vmatprep.subr.bf16.mxu0 0
  %220 = vmatpush1.bf16.msra.mxu0 0
  %221 = vmatprep.subr.bf16.mxu0 0
  %222 = vmatpush1.bf16.msra.mxu0 0
  %223 = vmatprep.subr.bf16.mxu0 0
  %224 = vmatpush1.bf16.msra.mxu0 0
  %225 = vmatprep.subr.bf16.mxu0 0
  %226 = vmatpush1.bf16.msra.mxu0 0
  %227 = vmatprep.subr.bf16.mxu0 0
  %228 = vmatpush1.bf16.msra.mxu0 0
  %229 = vmatprep.subr.bf16.mxu0 0
  %230 = vmatpush1.bf16.msra.mxu0 0
  %231 = vmatprep.subr.bf16.mxu0 0
  %232 = vmatpush1.bf16.msra.mxu0 0
  %233 = vmatprep.subr.bf16.mxu0 0
  %234 = vmatpush1.bf16.msra.mxu0 0
  %235 = vmatprep.subr.bf16.mxu0 0
  %236 = vmatpush1.bf16.msra.mxu0 0
  %237 = vmatprep.subr.bf16.mxu0 0
  %238 = vmatpush1.bf16.msra.mxu0 0
  %239 = vmatprep.subr.bf16.mxu0 0
  %240 = vmatpush1.bf16.msra.mxu0 0
  %241 = vmatprep.mubr.bf16.mxu0 0
  %242 = vmatmul.mubr.bf16.gmra.mrb[0].mxu0 %v207
  %v243 = vpop.f32.mrb[0].mxu0
  %v244 = vadd.f32 0.0, %v243
  %v245 = vpop.f32.mrb[0].mxu0
  %v246 = vadd.f32 0.0, %v245
  %v247 = vpop.f32.mrb[0].mxu0
  %v248 = vpop.f32.mrb[0].mxu0
  %249 = vdwg.mxu0
  %250 = vmatprep.subr.bf16.mxu0 %v144
  %251 = vmatpush1.bf16.msra.mxu0 %v143
  %252 = vmatprep.subr.bf16.mxu0 %v160
  %253 = vmatpush1.bf16.msra.mxu0 %v159
  %254 = vmatprep.subr.bf16.mxu0 0
  %255 = vmatpush1.bf16.msra.mxu0 0
  %256 = vmatprep.subr.bf16.mxu0 0
  %257 = vmatpush1.bf16.msra.mxu0 0
  %258 = vmatprep.subr.bf16.mxu0 0
  %259 = vmatpush1.bf16.msra.mxu0 0
  %260 = vmatprep.subr.bf16.mxu0 0
  %261 = vmatpush1.bf16.msra.mxu0 0
  %262 = vmatprep.subr.bf16.mxu0 0
  %263 = vmatpush1.bf16.msra.mxu0 0
  %264 = vmatprep.subr.bf16.mxu0 0
  %265 = vmatpush1.bf16.msra.mxu0 0
  %266 = vmatprep.subr.bf16.mxu0 0
  %267 = vmatpush1.bf16.msra.mxu0 0
  %268 = vmatprep.subr.bf16.mxu0 0
  %269 = vmatpush1.bf16.msra.mxu0 0
  %270 = vmatprep.subr.bf16.mxu0 0
  %271 = vmatpush1.bf16.msra.mxu0 0
  %272 = vmatprep.subr.bf16.mxu0 0
  %273 = vmatpush1.bf16.msra.mxu0 0
  %274 = vmatprep.subr.bf16.mxu0 0
  %275 = vmatpush1.bf16.msra.mxu0 0
  %276 = vmatprep.subr.bf16.mxu0 0
  %277 = vmatpush1.bf16.msra.mxu0 0
  %278 = vmatprep.subr.bf16.mxu0 0
  %279 = vmatpush1.bf16.msra.mxu0 0
  %280 = vmatprep.subr.bf16.mxu0 0
  %281 = vmatpush1.bf16.msra.mxu0 0
  %282 = vmatprep.mubr.bf16.mxu0 0
  %283 = vmatmul.mubr.bf16.gmra.mrb[0].mxu0 %v207
  %v284 = vpop.f32.mrb[0].mxu0
  %v285 = vadd.f32 0.0, %v284
  %v286 = vpop.f32.mrb[0].mxu0
  %v287 = vadd.f32 0.0, %v286
  %v288 = vpop.f32.mrb[0].mxu0
  %v289 = vpop.f32.mrb[0].mxu0
  %290 = vdwg.mxu0
  %291 = vmatprep.subr.bf16.mxu0 %v146
  %292 = vmatpush1.bf16.msra.mxu0 %v145
  %293 = vmatprep.subr.bf16.mxu0 %v162
  %294 = vmatpush1.bf16.msra.mxu0 %v161
  %295 = vmatprep.subr.bf16.mxu0 0
  %296 = vmatpush1.bf16.msra.mxu0 0
  %297 = vmatprep.subr.bf16.mxu0 0
  %298 = vmatpush1.bf16.msra.mxu0 0
  %299 = vmatprep.subr.bf16.mxu0 0
  %300 = vmatpush1.bf16.msra.mxu0 0
  %301 = vmatprep.subr.bf16.mxu0 0
  %302 = vmatpush1.bf16.msra.mxu0 0
  %303 = vmatprep.subr.bf16.mxu0 0
  %304 = vmatpush1.bf16.msra.mxu0 0
  %305 = vmatprep.subr.bf16.mxu0 0
  %306 = vmatpush1.bf16.msra.mxu0 0
  %307 = vmatprep.subr.bf16.mxu0 0
  %308 = vmatpush1.bf16.msra.mxu0 0
  %309 = vmatprep.subr.bf16.mxu0 0
  %310 = vmatpush1.bf16.msra.mxu0 0
  %311 = vmatprep.subr.bf16.mxu0 0
  %312 = vmatpush1.bf16.msra.mxu0 0
  %313 = vmatprep.subr.bf16.mxu0 0
  %314 = vmatpush1.bf16.msra.mxu0 0
  %315 = vmatprep.subr.bf16.mxu0 0
  %316 = vmatpush1.bf16.msra.mxu0 0
  %317 = vmatprep.subr.bf16.mxu0 0
  %318 = vmatpush1.bf16.msra.mxu0 0
  %319 = vmatprep.subr.bf16.mxu0 0
  %320 = vmatpush1.bf16.msra.mxu0 0
  %321 = vmatprep.subr.bf16.mxu0 0
  %322 = vmatpush1.bf16.msra.mxu0 0
  %323 = vmatprep.mubr.bf16.mxu0 0
  %324 = vmatmul.mubr.bf16.gmra.mrb[0].mxu0 %v207
  %v325 = vpop.f32.mrb[0].mxu0
  %v326 = vadd.f32 0.0, %v325
  %v327 = vpop.f32.mrb[0].mxu0
  %v328 = vadd.f32 0.0, %v327
  %v329 = vpop.f32.mrb[0].mxu0
  %v330 = vpop.f32.mrb[0].mxu0
  %331 = vdwg.mxu0
  %332 = vmatprep.subr.bf16.mxu0 %v148
  %333 = vmatpush1.bf16.msra.mxu0 %v147
  %334 = vmatprep.subr.bf16.mxu0 %v164
  %335 = vmatpush1.bf16.msra.mxu0 %v163
  %336 = vmatprep.subr.bf16.mxu0 0
  %337 = vmatpush1.bf16.msra.mxu0 0
  %338 = vmatprep.subr.bf16.mxu0 0
  %339 = vmatpush1.bf16.msra.mxu0 0
  %340 = vmatprep.subr.bf16.mxu0 0
  %341 = vmatpush1.bf16.msra.mxu0 0
  %342 = vmatprep.subr.bf16.mxu0 0
  %343 = vmatpush1.bf16.msra.mxu0 0
  %344 = vmatprep.subr.bf16.mxu0 0
  %345 = vmatpush1.bf16.msra.mxu0 0
  %346 = vmatprep.subr.bf16.mxu0 0
  %347 = vmatpush1.bf16.msra.mxu0 0
  %348 = vmatprep.subr.bf16.mxu0 0
  %349 = vmatpush1.bf16.msra.mxu0 0
  %350 = vmatprep.subr.bf16.mxu0 0
  %351 = vmatpush1.bf16.msra.mxu0 0
  %352 = vmatprep.subr.bf16.mxu0 0
  %353 = vmatpush1.bf16.msra.mxu0 0
  %354 = vmatprep.subr.bf16.mxu0 0
  %355 = vmatpush1.bf16.msra.mxu0 0
  %356 = vmatprep.subr.bf16.mxu0 0
  %357 = vmatpush1.bf16.msra.mxu0 0
  %358 = vmatprep.subr.bf16.mxu0 0
  %359 = vmatpush1.bf16.msra.mxu0 0
  %360 = vmatprep.subr.bf16.mxu0 0
  %361 = vmatpush1.bf16.msra.mxu0 0
  %362 = vmatprep.subr.bf16.mxu0 0
  %363 = vmatpush1.bf16.msra.mxu0 0
  %364 = vmatprep.mubr.bf16.mxu0 0
  %365 = vmatmul.mubr.bf16.gmra.mrb[0].mxu0 %v207
  %v366 = vpop.f32.mrb[0].mxu0
  %v367 = vadd.f32 0.0, %v366
  %v368 = vpop.f32.mrb[0].mxu0
  %v369 = vadd.f32 0.0, %v368
  %v370 = vpop.f32.mrb[0].mxu0
  %v371 = vpop.f32.mrb[0].mxu0
  %372 = vdwg.mxu0
  %373 = vmatprep.subr.bf16.mxu0 %v150
  %374 = vmatpush1.bf16.msra.mxu0 %v149
  %375 = vmatprep.subr.bf16.mxu0 %v166
  %376 = vmatpush1.bf16.msra.mxu0 %v165
  %377 = vmatprep.subr.bf16.mxu0 0
  %378 = vmatpush1.bf16.msra.mxu0 0
  %379 = vmatprep.subr.bf16.mxu0 0
  %380 = vmatpush1.bf16.msra.mxu0 0
  %381 = vmatprep.subr.bf16.mxu0 0
  %382 = vmatpush1.bf16.msra.mxu0 0
  %383 = vmatprep.subr.bf16.mxu0 0
  %384 = vmatpush1.bf16.msra.mxu0 0
  %385 = vmatprep.subr.bf16.mxu0 0
  %386 = vmatpush1.bf16.msra.mxu0 0
  %387 = vmatprep.subr.bf16.mxu0 0
  %388 = vmatpush1.bf16.msra.mxu0 0
  %389 = vmatprep.subr.bf16.mxu0 0
  %390 = vmatpush1.bf16.msra.mxu0 0
  %391 = vmatprep.subr.bf16.mxu0 0
  %392 = vmatpush1.bf16.msra.mxu0 0
  %393 = vmatprep.subr.bf16.mxu0 0
  %394 = vmatpush1.bf16.msra.mxu0 0
  %395 = vmatprep.subr.bf16.mxu0 0
  %396 = vmatpush1.bf16.msra.mxu0 0
  %397 = vmatprep.subr.bf16.mxu0 0
  %398 = vmatpush1.bf16.msra.mxu0 0
  %399 = vmatprep.subr.bf16.mxu0 0
  %400 = vmatpush1.bf16.msra.mxu0 0
  %401 = vmatprep.subr.bf16.mxu0 0
  %402 = vmatpush1.bf16.msra.mxu0 0
  %403 = vmatprep.subr.bf16.mxu0 0
  %404 = vmatpush1.bf16.msra.mxu0 0
  %405 = vmatprep.mubr.bf16.mxu0 0
  %406 = vmatmul.mubr.bf16.gmra.mrb[0].mxu0 %v207
  %v407 = vpop.f32.mrb[0].mxu0
  %v408 = vadd.f32 0.0, %v407
  %v409 = vpop.f32.mrb[0].mxu0
  %v410 = vadd.f32 0.0, %v409
  %v411 = vpop.f32.mrb[0].mxu0
  %v412 = vpop.f32.mrb[0].mxu0
  %413 = vdwg.mxu0
  %414 = vmatprep.subr.bf16.mxu0 %v152
  %415 = vmatpush1.bf16.msra.mxu0 %v151
  %416 = vmatprep.subr.bf16.mxu0 %v168
  %417 = vmatpush1.bf16.msra.mxu0 %v167
  %418 = vmatprep.subr.bf16.mxu0 0
  %419 = vmatpush1.bf16.msra.mxu0 0
  %420 = vmatprep.subr.bf16.mxu0 0
  %421 = vmatpush1.bf16.msra.mxu0 0
  %422 = vmatprep.subr.bf16.mxu0 0
  %423 = vmatpush1.bf16.msra.mxu0 0
  %424 = vmatprep.subr.bf16.mxu0 0
  %425 = vmatpush1.bf16.msra.mxu0 0
  %426 = vmatprep.subr.bf16.mxu0 0
  %427 = vmatpush1.bf16.msra.mxu0 0
  %428 = vmatprep.subr.bf16.mxu0 0
  %429 = vmatpush1.bf16.msra.mxu0 0
  %430 = vmatprep.subr.bf16.mxu0 0
  %431 = vmatpush1.bf16.msra.mxu0 0
  %432 = vmatprep.subr.bf16.mxu0 0
  %433 = vmatpush1.bf16.msra.mxu0 0
  %434 = vmatprep.subr.bf16.mxu0 0
  %435 = vmatpush1.bf16.msra.mxu0 0
  %436 = vmatprep.subr.bf16.mxu0 0
  %437 = vmatpush1.bf16.msra.mxu0 0
  %438 = vmatprep.subr.bf16.mxu0 0
  %439 = vmatpush1.bf16.msra.mxu0 0
  %440 = vmatprep.subr.bf16.mxu0 0
  %441 = vmatpush1.bf16.msra.mxu0 0
  %442 = vmatprep.subr.bf16.mxu0 0
  %443 = vmatpush1.bf16.msra.mxu0 0
  %444 = vmatprep.subr.bf16.mxu0 0
  %445 = vmatpush1.bf16.msra.mxu0 0
  %446 = vmatprep.mubr.bf16.mxu0 0
  %447 = vmatmul.mubr.bf16.gmra.mrb[0].mxu0 %v207
  %v448 = vpop.f32.mrb[0].mxu0
  %v449 = vadd.f32 0.0, %v448
  %v450 = vpop.f32.mrb[0].mxu0
  %v451 = vadd.f32 0.0, %v450
  %v452 = vpop.f32.mrb[0].mxu0
  %v453 = vpop.f32.mrb[0].mxu0
  %454 = vdwg.mxu0
  %455 = vmatprep.subr.bf16.mxu0 %v154
  %456 = vmatpush1.bf16.msra.mxu0 %v153
  %457 = vmatprep.subr.bf16.mxu0 %v170
  %458 = vmatpush1.bf16.msra.mxu0 %v169
  %459 = vmatprep.subr.bf16.mxu0 0
  %460 = vmatpush1.bf16.msra.mxu0 0
  %461 = vmatprep.subr.bf16.mxu0 0
  %462 = vmatpush1.bf16.msra.mxu0 0
  %463 = vmatprep.subr.bf16.mxu0 0
  %464 = vmatpush1.bf16.msra.mxu0 0
  %465 = vmatprep.subr.bf16.mxu0 0
  %466 = vmatpush1.bf16.msra.mxu0 0
  %467 = vmatprep.subr.bf16.mxu0 0
  %468 = vmatpush1.bf16.msra.mxu0 0
  %469 = vmatprep.subr.bf16.mxu0 0
  %470 = vmatpush1.bf16.msra.mxu0 0
  %471 = vmatprep.subr.bf16.mxu0 0
  %472 = vmatpush1.bf16.msra.mxu0 0
  %473 = vmatprep.subr.bf16.mxu0 0
  %474 = vmatpush1.bf16.msra.mxu0 0
  %475 = vmatprep.subr.bf16.mxu0 0
  %476 = vmatpush1.bf16.msra.mxu0 0
  %477 = vmatprep.subr.bf16.mxu0 0
  %478 = vmatpush1.bf16.msra.mxu0 0
  %479 = vmatprep.subr.bf16.mxu0 0
  %480 = vmatpush1.bf16.msra.mxu0 0
  %481 = vmatprep.subr.bf16.mxu0 0
  %482 = vmatpush1.bf16.msra.mxu0 0
  %483 = vmatprep.subr.bf16.mxu0 0
  %484 = vmatpush1.bf16.msra.mxu0 0
  %485 = vmatprep.subr.bf16.mxu0 0
  %486 = vmatpush1.bf16.msra.mxu0 0
  %487 = vmatprep.mubr.bf16.mxu0 0
  %488 = vmatmul.mubr.bf16.gmra.mrb[0].mxu0 %v207
  %v489 = vpop.f32.mrb[0].mxu0
  %v490 = vadd.f32 0.0, %v489
  %v491 = vpop.f32.mrb[0].mxu0
  %v492 = vadd.f32 0.0, %v491
  %v493 = vpop.f32.mrb[0].mxu0
  %v494 = vpop.f32.mrb[0].mxu0
  %495 = vdwg.mxu0
  %496 = vmatprep.subr.bf16.mxu0 %v156
  %497 = vmatpush1.bf16.msra.mxu0 %v155
  %498 = vmatprep.subr.bf16.mxu0 %v172
  %499 = vmatpush1.bf16.msra.mxu0 %v171
  %500 = vmatprep.subr.bf16.mxu0 0
  %501 = vmatpush1.bf16.msra.mxu0 0
  %502 = vmatprep.subr.bf16.mxu0 0
  %503 = vmatpush1.bf16.msra.mxu0 0
  %504 = vmatprep.subr.bf16.mxu0 0
  %505 = vmatpush1.bf16.msra.mxu0 0
  %506 = vmatprep.subr.bf16.mxu0 0
  %507 = vmatpush1.bf16.msra.mxu0 0
  %508 = vmatprep.subr.bf16.mxu0 0
  %509 = vmatpush1.bf16.msra.mxu0 0
  %510 = vmatprep.subr.bf16.mxu0 0
  %511 = vmatpush1.bf16.msra.mxu0 0
  %512 = vmatprep.subr.bf16.mxu0 0
  %513 = vmatpush1.bf16.msra.mxu0 0
  %514 = vmatprep.subr.bf16.mxu0 0
  %515 = vmatpush1.bf16.msra.mxu0 0
  %516 = vmatprep.subr.bf16.mxu0 0
  %517 = vmatpush1.bf16.msra.mxu0 0
  %518 = vmatprep.subr.bf16.mxu0 0
  %519 = vmatpush1.bf16.msra.mxu0 0
  %520 = vmatprep.subr.bf16.mxu0 0
  %521 = vmatpush1.bf16.msra.mxu0 0
  %522 = vmatprep.subr.bf16.mxu0 0
  %523 = vmatpush1.bf16.msra.mxu0 0
  %524 = vmatprep.subr.bf16.mxu0 0
  %525 = vmatpush1.bf16.msra.mxu0 0
  %526 = vmatprep.subr.bf16.mxu0 0
  %527 = vmatpush1.bf16.msra.mxu0 0
  %528 = vmatprep.mubr.bf16.mxu0 0
  %529 = vmatmul.mubr.bf16.gmra.mrb[0].mxu0 %v207
  %v530 = vpop.f32.mrb[0].mxu0
  %v531 = vadd.f32 0.0, %v530
  %v532 = vpop.f32.mrb[0].mxu0
  %v533 = vadd.f32 0.0, %v532
  %v534 = vpop.f32.mrb[0].mxu0
  %v535 = vpop.f32.mrb[0].mxu0
  %536 = vdwg.mxu0
  %v537 = vtanh.pop %v244
  %v538 = vtanh.pop %v246
  %v539 = vtanh.pop %v285
  %v540 = vtanh.pop %v287
  %v541 = vtanh.pop %v326
  %v542 = vtanh.pop %v328
  %v543 = vtanh.pop %v367
  %v544 = vtanh.pop %v369
  %v545 = vtanh.pop %v408
  %v546 = vtanh.pop %v410
  %v547 = vtanh.pop %v449
  %v548 = vtanh.pop %v451
  %v549 = vtanh.pop %v490
  %v550 = vtanh.pop %v492
  %v551 = vtanh.pop %v531
  %v552 = vtanh.pop %v533
  %v569 = vcombine.low %v537, %v538
  %v570 = vcombine.low %v539, %v540
  %v571 = vcombine.low %v541, %v542
  %v572 = vcombine.low %v543, %v544
  %v573 = vcombine.low %v545, %v546
  %v574 = vcombine.low %v547, %v548
  %v575 = vcombine.low %v549, %v550
  %v576 = vcombine.low %v551, %v552
  %585 = vst [vmem:[%s2] sm:$0x77] %v569
  %586 = vst [vmem:[%s2 + $0x8] sm:$0x77] %v570
  %587 = vst [vmem:[%s2 + $0x10] sm:$0x77] %v571
  %588 = vst [vmem:[%s2 + $0x18] sm:$0x77] %v572
  %589 = vst [vmem:[%s2 + $0x20] sm:$0x77] %v573
  %590 = vst [vmem:[%s2 + $0x28] sm:$0x77] %v574
  %591 = vst [vmem:[%s2 + $0x30] sm:$0x77] %v575
  %592 = vst [vmem:[%s2 + $0x38] sm:$0x77] %v576
  // Predicated region
  $region10: #{generator_forward.38} parent=0 // pred_check
    _
  $region11: #{generator_forward.38} parent=0 // pred_check_branch
    %594 = sbr.rel (0) target = $region13
  $region12: #{generator_forward.38} parent=0 // pred_region
    _
  $region13: #{generator_forward.38} parent=0 // pred_fallthru
    _
  // Predicated region
  $region14: #{generator_forward.38} parent=0 // pred_check
    _
  $region15: #{generator_forward.38} parent=0 // pred_check_branch
    %596 = sbr.rel (0) target = $region17
  $region16: #{generator_forward.38} parent=0 // pred_region
    _
  $region17: #{generator_forward.38} parent=0 // pred_fallthru
    _

</llo_original>
